<compile_context>
chip_gen: v6e
topology: v6e:2x2x1
jax: 0.10.0
libtpu: 0.0.40
codegen_flags: <defaults>
</compile_context>

<pallas_src>
import functools
import math

import jax
import jax.numpy as jnp
from jax.experimental import pallas as pl
from jax.experimental.pallas import tpu as pltpu


ROW_TILE = 8                                 # output rows per conv grid step
BBOX_XFORM_CLIP = math.log(1000.0 / 16.0)    # torchvision BoxCoder clamp


def _round_up(x, m):
    return ((x + m - 1) // m) * m


# ----------------------------------------------------------------------------
# Pallas kernels
# ----------------------------------------------------------------------------

def _conv3x3_accum(x_ref, w_ref, row_start, th, wout):
    """3x3 / stride-1 / pad-1 conv for `th` output rows as 9 MXU matmuls.

    x_ref: (1, H+2, W+2, Cin) bf16 (spatially pre-padded image, full per block)
    w_ref: (9, Cin, Cout) bf16  (tap-major, matches weight.reshape(9, Cin, Cout))
    returns f32 (th*wout, Cout) accumulator (bias / activation not applied).
    """
    cin = x_ref.shape[-1]
    cout = w_ref.shape[-1]
    acc = jnp.zeros((th * wout, cout), jnp.float32)
    for ky in range(3):
        for kx in range(3):
            patch = x_ref[0, pl.ds(row_start + ky, th), kx:kx + wout, :]
            patch = patch.reshape(th * wout, cin)
            acc = acc + jnp.dot(patch, w_ref[ky * 3 + kx],
                                preferred_element_type=jnp.float32)
    return acc


def _conv3x3_relu_kernel(x_ref, w_ref, b_ref, o_ref):
    # o_ref: (1, TH*W, Cout) -- flattened rows keep the store lane-dense.
    th_w = o_ref.shape[1]
    cout = o_ref.shape[2]
    wout = x_ref.shape[2] - 2
    th = th_w // wout
    row_start = pl.multiple_of(pl.program_id(1) * th, th)
    acc = _conv3x3_accum(x_ref, w_ref, row_start, th, wout)
    acc = jnp.maximum(acc + b_ref[...], 0.0)
    o_ref[...] = acc.reshape(1, th_w, cout).astype(o_ref.dtype)


def _rpn_fused_kernel(x_ref, wc_ref, bc_ref, wh_ref, bh_ref, o_ref):
    """RPN 3x3 conv + ReLU + fused (cls|box) 1x1 heads; `t` never leaves VMEM."""
    th_w = o_ref.shape[1]
    nh = o_ref.shape[2]
    wout = x_ref.shape[2] - 2
    th = th_w // wout
    row_start = pl.multiple_of(pl.program_id(1) * th, th)
    t = _conv3x3_accum(x_ref, wc_ref, row_start, th, wout)
    t = jnp.maximum(t + bc_ref[...], 0.0)                       # (th*w, C) f32
    head = jnp.dot(t.astype(jnp.bfloat16), wh_ref[...],
                   preferred_element_type=jnp.float32) + bh_ref[...]
    o_ref[...] = head.reshape(1, th_w, nh).astype(o_ref.dtype)


def _roi_head_kernel(x_ref, w1_ref, b1_ref, w2_ref, b2_ref, wp_ref, bp_ref,
                     o_ref):
    """fc1 -> ReLU -> fc2 -> ReLU -> fused (cls|box) predictor, all in VMEM."""
    h1 = jnp.maximum(
        jnp.dot(x_ref[...], w1_ref[...], preferred_element_type=jnp.float32)
        + b1_ref[...], 0.0)
    h2 = jnp.maximum(
        jnp.dot(h1.astype(jnp.bfloat16), w2_ref[...],
                preferred_element_type=jnp.float32) + b2_ref[...], 0.0)
    o_ref[...] = (jnp.dot(h2.astype(jnp.bfloat16), wp_ref[...],
                          preferred_element_type=jnp.float32) + bp_ref[...])


def _decode_boxes_kernel(ad_ref, o_ref, *, wx, wy, ww, wh, clip_val,
                         img_h, img_w):
    """Faster-RCNN box decode on a packed (8, tile) block.

    Rows 0..3 = anchor x1,y1,x2,y2 ; rows 4..7 = deltas dx,dy,dw,dh.
    Elementwise math stays f32 (VPU/EUP friendly on all generations).
    """
    ax1 = ad_ref[0:1, :]
    ay1 = ad_ref[1:2, :]
    ax2 = ad_ref[2:3, :]
    ay2 = ad_ref[3:4, :]
    dx = ad_ref[4:5, :] * (1.0 / wx)
    dy = ad_ref[5:6, :] * (1.0 / wy)
    dw = jnp.minimum(ad_ref[6:7, :] * (1.0 / ww), clip_val)
    dh = jnp.minimum(ad_ref[7:8, :] * (1.0 / wh), clip_val)

    aw = ax2 - ax1
    ah = ay2 - ay1
    cx = ax1 + 0.5 * aw
    cy = ay1 + 0.5 * ah
    pcx = cx + dx * aw
    pcy = cy + dy * ah
    pw = aw * jnp.exp(dw)
    ph = ah * jnp.exp(dh)

    # Direct per-row stores (no sublane concatenate), clipped to the image.
    o_ref[0:1, :] = jnp.clip(pcx - 0.5 * pw, 0.0, img_w)
    o_ref[1:2, :] = jnp.clip(pcy - 0.5 * ph, 0.0, img_h)
    o_ref[2:3, :] = jnp.clip(pcx + 0.5 * pw, 0.0, img_w)
    o_ref[3:4, :] = jnp.clip(pcy + 0.5 * ph, 0.0, img_h)


# ----------------------------------------------------------------------------
# Pallas wrappers
# ----------------------------------------------------------------------------

def conv3x3_bias_relu(x_pad, w9, b, out_dtype=jnp.bfloat16, row_tile=ROW_TILE):
    """x_pad: (N, H+2, W+2, Cin) spatially pre-padded; returns (N, H, W, Cout)."""
    n, hp2, wp2, cin = x_pad.shape
    h, w = hp2 - 2, wp2 - 2
    cout = w9.shape[-1]
    th = row_tile if h % row_tile == 0 else h
    out = pl.pallas_call(
        _conv3x3_relu_kernel,
        out_shape=jax.ShapeDtypeStruct((n, h * w, cout), out_dtype),
        grid=(n, h // th),
        in_specs=[
            pl.BlockSpec((1, hp2, wp2, cin), lambda ni, ri: (ni, 0, 0, 0)),
            pl.BlockSpec((9, cin, cout), lambda ni, ri: (0, 0, 0)),
            pl.BlockSpec((1, cout), lambda ni, ri: (0, 0)),
        ],
        out_specs=pl.BlockSpec((1, th * w, cout), lambda ni, ri: (ni, ri, 0)),
        compiler_params=pltpu.CompilerParams(
            dimension_semantics=("parallel", "parallel")),
    )(x_pad.astype(jnp.bfloat16), w9.astype(jnp.bfloat16),
      b.reshape(1, -1).astype(jnp.float32))
    return out.reshape(n, h, w, cout)


def rpn_head_fused(feat, rpn_w9, rpn_b, head_w, head_b, row_tile=ROW_TILE):
    """feat: (N, H, W, C) bf16 -> fused RPN conv+heads output (N, H*W, NH)."""
    n, h, w, c = feat.shape
    nh = head_w.shape[-1]
    th = row_tile if h % row_tile == 0 else h
    xp = jnp.pad(feat, ((0, 0), (1, 1), (1, 1), (0, 0)))
    return pl.pallas_call(
        _rpn_fused_kernel,
        out_shape=jax.ShapeDtypeStruct((n, h * w, nh), jnp.float32),
        grid=(n, h // th),
        in_specs=[
            pl.BlockSpec((1, h + 2, w + 2, c), lambda ni, ri: (ni, 0, 0, 0)),
            pl.BlockSpec((9, c, c), lambda ni, ri: (0, 0, 0)),
            pl.BlockSpec((1, c), lambda ni, ri: (0, 0)),
            pl.BlockSpec((c, nh), lambda ni, ri: (0, 0)),
            pl.BlockSpec((1, nh), lambda ni, ri: (0, 0)),
        ],
        out_specs=pl.BlockSpec((1, th * w, nh), lambda ni, ri: (ni, ri, 0)),
        compiler_params=pltpu.CompilerParams(
            dimension_semantics=("parallel", "parallel")),
    )(xp.astype(jnp.bfloat16), rpn_w9.astype(jnp.bfloat16),
      rpn_b.reshape(1, -1).astype(jnp.float32),
      head_w.astype(jnp.bfloat16),
      head_b.reshape(1, -1).astype(jnp.float32))


def roi_box_head(x, params):
    """Fused box head: fc1 -> fc2 -> (cls|box) predictor (padded to 128 lanes)."""
    m, k = x.shape
    hidden = params["fc1_w"].shape[1]
    n_out = params["pred_w"].shape[1]
    m_pad = _round_up(m, 8)
    xp = x if m_pad == m else jnp.pad(x, ((0, m_pad - m), (0, 0)))
    out = pl.pallas_call(
        _roi_head_kernel,
        out_shape=jax.ShapeDtypeStruct((m_pad, n_out), jnp.float32),
        grid=(1,),
        in_specs=[
            pl.BlockSpec((m_pad, k), lambda i: (0, 0)),
            pl.BlockSpec((k, hidden), lambda i: (0, 0)),
            pl.BlockSpec((1, hidden), lambda i: (0, 0)),
            pl.BlockSpec((hidden, hidden), lambda i: (0, 0)),
            pl.BlockSpec((1, hidden), lambda i: (0, 0)),
            pl.BlockSpec((hidden, n_out), lambda i: (0, 0)),
            pl.BlockSpec((1, n_out), lambda i: (0, 0)),
        ],
        out_specs=pl.BlockSpec((m_pad, n_out), lambda i: (0, 0)),
        compiler_params=pltpu.CompilerParams(
            dimension_semantics=("arbitrary",)),
    )(xp.astype(jnp.bfloat16),
      params["fc1_w"].astype(jnp.bfloat16),
      params["fc1_b"].reshape(1, -1).astype(jnp.float32),
      params["fc2_w"].astype(jnp.bfloat16),
      params["fc2_b"].reshape(1, -1).astype(jnp.float32),
      params["pred_w"].astype(jnp.bfloat16),
      params["pred_b"].reshape(1, -1).astype(jnp.float32))
    return out[:m]


def decode_boxes(anchors, deltas, weights, image_hw, lane_tile=1024):
    """Box decode + clip. anchors/deltas: (M, 4) -> boxes (M, 4)."""
    m = anchors.shape[0]
    tile = min(lane_tile, _round_up(m, 128))
    m_pad = _round_up(m, tile)
    packed = jnp.concatenate(
        [anchors.astype(jnp.float32), deltas.astype(jnp.float32)], axis=1).T
    if m_pad != m:
        packed = jnp.pad(packed, ((0, 0), (0, m_pad - m)))     # (8, M_pad)
    kernel = functools.partial(
        _decode_boxes_kernel,
        wx=float(weights[0]), wy=float(weights[1]),
        ww=float(weights[2]), wh=float(weights[3]),
        clip_val=BBOX_XFORM_CLIP,
        img_h=float(image_hw[0]), img_w=float(image_hw[1]))
    out = pl.pallas_call(
        kernel,
        out_shape=jax.ShapeDtypeStruct((4, m_pad), jnp.float32),
        grid=(m_pad // tile,),
        in_specs=[pl.BlockSpec((8, tile), lambda i: (0, i))],
        out_specs=pl.BlockSpec((4, tile), lambda i: (0, i)),
        compiler_params=pltpu.CompilerParams(
            dimension_semantics=("parallel",)),
    )(packed)
    return out[:, :m].T


# ----------------------------------------------------------------------------
# JAX glue (anchors, roi pooling, top-k selection)
# ----------------------------------------------------------------------------

def make_anchors(h, w, sizes, stride=1.0):
    ys = (jnp.arange(h, dtype=jnp.float32) + 0.5) * stride
    xs = (jnp.arange(w, dtype=jnp.float32) + 0.5) * stride
    cy, cx = jnp.meshgrid(ys, xs, indexing="ij")
    centers = jnp.stack([cx, cy, cx, cy], axis=-1).reshape(h * w, 1, 4)
    szs = jnp.asarray(sizes, jnp.float32).reshape(1, -1, 1)
    half = jnp.concatenate([-szs, -szs, szs, szs], axis=-1) * 0.5
    return (centers + half).reshape(-1, 4)                       # (H*W*A, 4)


def roi_pool(features_nhwc, proposals, pool_size):
    """Nearest-neighbour ROI pooling to (P, P).  features:(N,H,W,C) boxes:(N,R,4)."""
    _, h, w, _ = features_nhwc.shape
    grid = (jnp.arange(pool_size, dtype=jnp.float32) + 0.5) / pool_size

    def pool_one(feat, box):
        x1, y1, x2, y2 = box[0], box[1], box[2], box[3]
        ys = y1 + grid * (y2 - y1)
        xs = x1 + grid * (x2 - x1)
        yi = jnp.clip(jnp.floor(ys), 0, h - 1).astype(jnp.int32)
        xi = jnp.clip(jnp.floor(xs), 0, w - 1).astype(jnp.int32)
        return feat[yi][:, xi]                                   # (P, P, C)

    # TODO(synk): true RoIAlign uses bilinear sampling; nearest sampling +
    # XLA gather kept here (a SMEM-prefetch DMA-gather kernel is the next step).
    return jax.vmap(lambda f, bs: jax.vmap(lambda b: pool_one(f, b))(bs))(
        features_nhwc, proposals)


# ----------------------------------------------------------------------------
# Sub-modules of GeneralizedRCNN
# ----------------------------------------------------------------------------

def backbone_forward(params, images_nchw):
    # GeneralizedRCNNTransform.normalize folded into the first conv:
    #   x - mean fuses into the NCHW->NHWC / pad / bf16 prep below,
    #   1/std is folded into bb_w9 at init time (exact, incl. zero padding).
    # TODO(synk): transform resize / batching to a common size is identity here.
    n, cin, h, w = images_nchw.shape
    cin_pad = params["bb_w9"].shape[1]
    x = jnp.transpose(images_nchw, (0, 2, 3, 1)).astype(jnp.float32)
    x = x - params["img_mean"].reshape(1, 1, 1, cin)
    x = jnp.pad(x, ((0, 0), (1, 1), (1, 1), (0, cin_pad - cin)))
    return conv3x3_bias_relu(x, params["bb_w9"], params["bb_b"],
                             out_dtype=jnp.bfloat16)             # (N, H, W, C)


def rpn_forward(params, features_nhwc, image_hw, top_n):
    n, h, w, _ = features_nhwc.shape
    a = params["num_anchors"]
    head = rpn_head_fused(features_nhwc, params["rpn_w9"], params["rpn_b"],
                          params["rpn_head_w"], params["rpn_head_b"])
    # head: (N, H*W, 128) ; cols [0:A) = objectness, [A:5A) = box deltas.
    m = h * w * a
    scores = head[..., :a].reshape(n, m)
    deltas = head[..., a:5 * a].reshape(n, h * w, a, 4).reshape(n, m, 4)

    anchors = make_anchors(h, w, params["anchor_sizes"])         # (M, 4)
    anchors_all = jnp.tile(anchors, (n, 1))                      # (N*M, 4)
    boxes = decode_boxes(anchors_all, deltas.reshape(n * m, 4),
                         weights=(1.0, 1.0, 1.0, 1.0),
                         image_hw=image_hw).reshape(n, m, 4)

    # TODO(synk): RPN NMS / min-size filtering omitted; top-k by objectness only.
    _, top_idx = jax.lax.top_k(scores, top_n)                    # (N, R)
    proposals = jnp.take_along_axis(boxes, top_idx[..., None], axis=1)
    return proposals, {}                                         # eval mode


def roi_heads_forward(params, features_nhwc, proposals, image_hw, pool_size):
    n, r, _ = proposals.shape
    c = features_nhwc.shape[-1]
    num_classes = params["num_classes"]

    pooled = roi_pool(features_nhwc, proposals, pool_size)       # (N,R,P,P,C)
    flat = pooled.reshape(n * r, pool_size * pool_size * c)

    head = roi_box_head(flat, params)                            # (NR, 128)
    cls_logits = head[:, :num_classes]
    box_regr = head[:, num_classes:5 * num_classes].reshape(n * r,
                                                            num_classes, 4)

    probs = jax.nn.softmax(cls_logits, axis=-1)
    labels = jnp.argmax(probs[:, 1:], axis=-1) + 1               # skip background
    det_scores = jnp.take_along_axis(probs, labels[:, None], axis=1)[:, 0]
    chosen_deltas = jnp.take_along_axis(
        box_regr, labels[:, None, None].astype(jnp.int32), axis=1)[:, 0, :]

    det_boxes = decode_boxes(proposals.reshape(n * r, 4), chosen_deltas,
                             weights=(10.0, 10.0, 5.0, 5.0),
                             image_hw=image_hw)

    det_boxes = det_boxes.reshape(n, r, 4)
    labels = labels.reshape(n, r)
    det_scores = det_scores.reshape(n, r)
    detections = [{"boxes": det_boxes[i], "labels": labels[i],
                   "scores": det_scores[i]} for i in range(n)]
    # TODO(synk): per-class score threshold + NMS of torchvision RoIHeads omitted.
    return detections, {}                                        # eval mode


def transform_postprocess(detections, image_sizes, original_image_sizes):
    out = []
    for det, isz, osz in zip(detections, image_sizes, original_image_sizes):
        ratio_h = osz[0] / isz[0]
        ratio_w = osz[1] / isz[1]
        scale = jnp.asarray([ratio_w, ratio_h, ratio_w, ratio_h], jnp.float32)
        out.append({"boxes": det["boxes"] * scale,
                    "labels": det["labels"],
                    "scores": det["scores"]})
    return out


# ----------------------------------------------------------------------------
# GeneralizedRCNN.forward (eval mode)
# ----------------------------------------------------------------------------

def generalized_rcnn_forward(params, images_nchw):
    n, _, h, w = images_nchw.shape
    original_image_sizes = [(h, w)] * n
    image_sizes = [(h, w)] * n

    # self.transform + self.backbone (normalization folded into first conv)
    features = backbone_forward(params, images_nchw)
    feature_dict = {0: features}                                 # single level

    # self.rpn(images, features, targets)
    proposals, proposal_losses = rpn_forward(
        params, feature_dict[0], (h, w), top_n=params["top_n"])

    # self.roi_heads(features, proposals, images.image_sizes, targets)
    detections, detector_losses = roi_heads_forward(
        params, feature_dict[0], proposals, (h, w),
        pool_size=params["pool_size"])

    # self.transform.postprocess(...)
    detections = transform_postprocess(detections, image_sizes,
                                       original_image_sizes)

    losses = {}
    losses.update(detector_losses)
    losses.update(proposal_losses)
    return detections                                            # eval mode


# ----------------------------------------------------------------------------
# Deterministic parameter init + demo
# ----------------------------------------------------------------------------

def init_params(key, cin=3, cin_pad=8, cfeat=128, num_anchors=3, hidden=128,
                num_classes=5, pool_size=4, top_n=16, head_pad=128):
    ks = jax.random.split(key, 10)
    f32 = jnp.float32

    def norm(k, shape, scale=0.1):
        return scale * jax.random.normal(k, shape, dtype=f32)

    img_mean = jnp.asarray([0.485, 0.456, 0.406], f32)
    img_std = jnp.asarray([0.229, 0.224, 0.225], f32)

    # backbone conv3x3 (kh, kw, cin, cout) == torch weight.permute(2,3,1,0)
    bb_w = norm(ks[0], (3, 3, cin, cfeat))
    bb_b = norm(ks[1], (cfeat,))
    # fold 1/std of image normalization into the weights; pad input channels
    # to 8 (extra channels have zero weights, so they are inert).
    bb_w_folded = bb_w / img_std.reshape(1, 1, cin, 1)
    bb_w_folded = jnp.pad(bb_w_folded, ((0, 0), (0, 0), (0, cin_pad - cin),
                                        (0, 0)))

    # RPN 3x3 conv + fused, lane-padded (cls | box) 1x1 heads
    rpn_w = norm(ks[2], (3, 3, cfeat, cfeat))
    rpn_b = norm(ks[3], (cfeat,))
    rpn_cls_w = norm(ks[4], (cfeat, num_anchors))
    rpn_box_w = norm(ks[5], (cfeat, num_anchors * 4))
    rpn_head_w = jnp.zeros((cfeat, head_pad), f32)
    rpn_head_w = rpn_head_w.at[:, :num_anchors].set(rpn_cls_w)
    rpn_head_w = rpn_head_w.at[:, num_anchors:5 * num_anchors].set(rpn_box_w)
    rpn_head_b = jnp.zeros((head_pad,), f32)        # cls/box biases are zero

    # ROI box head (two FC) + fused, lane-padded (cls | box) predictor
    fc1_w = norm(ks[6], (pool_size * pool_size * cfeat, hidden))
    fc2_w = norm(ks[7], (hidden, hidden))
    cls_w = norm(ks[8], (hidden, num_classes))
    box_w = norm(ks[9], (hidden, num_classes * 4))
    pred_w = jnp.zeros((hidden, head_pad), f32)
    pred_w = pred_w.at[:, :num_classes].set(cls_w)
    pred_w = pred_w.at[:, num_classes:5 * num_classes].set(box_w)
    pred_b = jnp.zeros((head_pad,), f32)

    return {
        "img_mean": img_mean,
        "img_std": img_std,
        "bb_w9": bb_w_folded.reshape(9, cin_pad, cfeat),
        "bb_b": bb_b,
        "rpn_w9": rpn_w.reshape(9, cfeat, cfeat),
        "rpn_b": rpn_b,
        "rpn_head_w": rpn_head_w,
        "rpn_head_b": rpn_head_b,
        "fc1_w": fc1_w, "fc1_b": jnp.zeros((hidden,), f32),
        "fc2_w": fc2_w, "fc2_b": jnp.zeros((hidden,), f32),
        "pred_w": pred_w, "pred_b": pred_b,
        "anchor_sizes": (4.0, 8.0, 16.0),
        "num_anchors": num_anchors,
        "num_classes": num_classes,
        "pool_size": pool_size,
        "top_n": top_n,
    }


if __name__ == "__main__":
    key = jax.random.PRNGKey(0)
    pkey, xkey = jax.random.split(key)
    params = init_params(pkey)

    # images: batch of 2 RGB images, 16x16 (NCHW, like PyTorch)
    images = jax.random.uniform(xkey, (2, 3, 16, 16), dtype=jnp.float32)

    detections = generalized_rcnn_forward(params, images)
    for det in detections:
        jax.block_until_ready(det["boxes"])
        jax.block_until_ready(det["scores"])
        jax.block_until_ready(det["labels"])

    assert detections[0]["boxes"].shape == (params["top_n"], 4)
    assert detections[0]["scores"].shape == (params["top_n"],)
    assert detections[0]["labels"].shape == (params["top_n"],)
    assert all(bool(jnp.all(jnp.isfinite(d["boxes"]))) for d in detections)
    print("KERNEL_OK")
</pallas_src>

<mosaic_0001>
module attributes {stable_mosaic.version = 11 : i64} {
  func.func @_conv3x3_relu_kernel(%arg0: i32, %arg1: i32, %arg2: memref<1x18x18x8xbf16, #tpu.memory_space<vmem>>, %arg3: memref<9x8x128xbf16, #tpu.memory_space<vmem>>, %arg4: memref<1x128xf32, #tpu.memory_space<vmem>>, %arg5: memref<1x128x128xbf16, #tpu.memory_space<vmem>>) attributes {dimension_semantics = [#tpu.dimension_semantics<parallel>, #tpu.dimension_semantics<parallel>], iteration_bounds = array<i64: 2, 2>, scalar_prefetch = 0 : i64, scratch_operands = 0 : i64, tpu.core_type = #tpu.core_type<tc>, window_params = [{transform_indices = @transform_0, window_bounds = array<i64: 1, 18, 18, 8>}, {pipeline_mode = #tpu.pipeline_mode<synchronous>, transform_indices = @transform_1, window_bounds = array<i64: 9, 8, 128>}, {pipeline_mode = #tpu.pipeline_mode<synchronous>, transform_indices = @transform_2, window_bounds = array<i64: 1, 128>}, {transform_indices = @transform_3, window_bounds = array<i64: 1, 128, 128>}]} {
    %c8_i32 = arith.constant 8 : i32
    %0 = arith.muli %arg1, %c8_i32 : i32
    %1 = tpu.assume_multiple %0, 8 : i32
    %cst = arith.constant 0.000000e+00 : f32
    %2 = vector.broadcast %cst : f32 to vector<128x128xf32>
    %c0_i32 = arith.constant 0 : i32
    %3 = arith.addi %1, %c0_i32 : i32
    %c0 = arith.constant 0 : index
    %4 = arith.index_cast %3 : i32 to index
    %c0_0 = arith.constant 0 : index
    %c0_1 = arith.constant 0 : index
    %5 = vector.load %arg2[%c0, %4, %c0_0, %c0_1] : memref<1x18x18x8xbf16, #tpu.memory_space<vmem>>, vector<1x8x16x8xbf16>
    %6 = vector.shape_cast %5 : vector<1x8x16x8xbf16> to vector<8x16x8xbf16>
    %7 = vector.shape_cast %6 : vector<8x16x8xbf16> to vector<128x8xbf16>
    %c0_2 = arith.constant 0 : index
    %c0_3 = arith.constant 0 : index
    %c0_4 = arith.constant 0 : index
    %8 = vector.load %arg3[%c0_2, %c0_3, %c0_4] : memref<9x8x128xbf16, #tpu.memory_space<vmem>>, vector<1x8x128xbf16>
    %9 = vector.shape_cast %8 : vector<1x8x128xbf16> to vector<8x128xbf16>
    %cst_5 = arith.constant dense<0.000000e+00> : vector<128x128xf32>
    %10 = tpu.matmul %7, %9, %cst_5 {dimension_numbers = #tpu.dot_dimension_numbers<[1], [0], [0], [1], [0, 0, 1, 1], [], []>} : vector<128x8xbf16>, vector<8x128xbf16>, vector<128x128xf32> -> vector<128x128xf32>
    %11 = arith.addf %2, %10 : vector<128x128xf32>
    %c0_i32_6 = arith.constant 0 : i32
    %12 = arith.addi %1, %c0_i32_6 : i32
    %c0_7 = arith.constant 0 : index
    %13 = arith.index_cast %12 : i32 to index
    %c1 = arith.constant 1 : index
    %c0_8 = arith.constant 0 : index
    %14 = vector.load %arg2[%c0_7, %13, %c1, %c0_8] : memref<1x18x18x8xbf16, #tpu.memory_space<vmem>>, vector<1x8x16x8xbf16>
    %15 = vector.shape_cast %14 : vector<1x8x16x8xbf16> to vector<8x16x8xbf16>
    %16 = vector.shape_cast %15 : vector<8x16x8xbf16> to vector<128x8xbf16>
    %c1_9 = arith.constant 1 : index
    %c0_10 = arith.constant 0 : index
    %c0_11 = arith.constant 0 : index
    %17 = vector.load %arg3[%c1_9, %c0_10, %c0_11] : memref<9x8x128xbf16, #tpu.memory_space<vmem>>, vector<1x8x128xbf16>
    %18 = vector.shape_cast %17 : vector<1x8x128xbf16> to vector<8x128xbf16>
    %cst_12 = arith.constant dense<0.000000e+00> : vector<128x128xf32>
    %19 = tpu.matmul %16, %18, %cst_12 {dimension_numbers = #tpu.dot_dimension_numbers<[1], [0], [0], [1], [0, 0, 1, 1], [], []>} : vector<128x8xbf16>, vector<8x128xbf16>, vector<128x128xf32> -> vector<128x128xf32>
    %20 = arith.addf %11, %19 : vector<128x128xf32>
    %c0_i32_13 = arith.constant 0 : i32
    %21 = arith.addi %1, %c0_i32_13 : i32
    %c0_14 = arith.constant 0 : index
    %22 = arith.index_cast %21 : i32 to index
    %c2 = arith.constant 2 : index
    %c0_15 = arith.constant 0 : index
    %23 = vector.load %arg2[%c0_14, %22, %c2, %c0_15] : memref<1x18x18x8xbf16, #tpu.memory_space<vmem>>, vector<1x8x16x8xbf16>
    %24 = vector.shape_cast %23 : vector<1x8x16x8xbf16> to vector<8x16x8xbf16>
    %25 = vector.shape_cast %24 : vector<8x16x8xbf16> to vector<128x8xbf16>
    %c2_16 = arith.constant 2 : index
    %c0_17 = arith.constant 0 : index
    %c0_18 = arith.constant 0 : index
    %26 = vector.load %arg3[%c2_16, %c0_17, %c0_18] : memref<9x8x128xbf16, #tpu.memory_space<vmem>>, vector<1x8x128xbf16>
    %27 = vector.shape_cast %26 : vector<1x8x128xbf16> to vector<8x128xbf16>
    %cst_19 = arith.constant dense<0.000000e+00> : vector<128x128xf32>
    %28 = tpu.matmul %25, %27, %cst_19 {dimension_numbers = #tpu.dot_dimension_numbers<[1], [0], [0], [1], [0, 0, 1, 1], [], []>} : vector<128x8xbf16>, vector<8x128xbf16>, vector<128x128xf32> -> vector<128x128xf32>
    %29 = arith.addf %20, %28 : vector<128x128xf32>
    %c1_i32 = arith.constant 1 : i32
    %30 = arith.addi %1, %c1_i32 : i32
    %c0_20 = arith.constant 0 : index
    %31 = arith.index_cast %30 : i32 to index
    %c0_21 = arith.constant 0 : index
    %c0_22 = arith.constant 0 : index
    %32 = vector.load %arg2[%c0_20, %31, %c0_21, %c0_22] : memref<1x18x18x8xbf16, #tpu.memory_space<vmem>>, vector<1x8x16x8xbf16>
    %33 = vector.shape_cast %32 : vector<1x8x16x8xbf16> to vector<8x16x8xbf16>
    %34 = vector.shape_cast %33 : vector<8x16x8xbf16> to vector<128x8xbf16>
    %c3 = arith.constant 3 : index
    %c0_23 = arith.constant 0 : index
    %c0_24 = arith.constant 0 : index
    %35 = vector.load %arg3[%c3, %c0_23, %c0_24] : memref<9x8x128xbf16, #tpu.memory_space<vmem>>, vector<1x8x128xbf16>
    %36 = vector.shape_cast %35 : vector<1x8x128xbf16> to vector<8x128xbf16>
    %cst_25 = arith.constant dense<0.000000e+00> : vector<128x128xf32>
    %37 = tpu.matmul %34, %36, %cst_25 {dimension_numbers = #tpu.dot_dimension_numbers<[1], [0], [0], [1], [0, 0, 1, 1], [], []>} : vector<128x8xbf16>, vector<8x128xbf16>, vector<128x128xf32> -> vector<128x128xf32>
    %38 = arith.addf %29, %37 : vector<128x128xf32>
    %c1_i32_26 = arith.constant 1 : i32
    %39 = arith.addi %1, %c1_i32_26 : i32
    %c0_27 = arith.constant 0 : index
    %40 = arith.index_cast %39 : i32 to index
    %c1_28 = arith.constant 1 : index
    %c0_29 = arith.constant 0 : index
    %41 = vector.load %arg2[%c0_27, %40, %c1_28, %c0_29] : memref<1x18x18x8xbf16, #tpu.memory_space<vmem>>, vector<1x8x16x8xbf16>
    %42 = vector.shape_cast %41 : vector<1x8x16x8xbf16> to vector<8x16x8xbf16>
    %43 = vector.shape_cast %42 : vector<8x16x8xbf16> to vector<128x8xbf16>
    %c4 = arith.constant 4 : index
    %c0_30 = arith.constant 0 : index
    %c0_31 = arith.constant 0 : index
    %44 = vector.load %arg3[%c4, %c0_30, %c0_31] : memref<9x8x128xbf16, #tpu.memory_space<vmem>>, vector<1x8x128xbf16>
    %45 = vector.shape_cast %44 : vector<1x8x128xbf16> to vector<8x128xbf16>
    %cst_32 = arith.constant dense<0.000000e+00> : vector<128x128xf32>
    %46 = tpu.matmul %43, %45, %cst_32 {dimension_numbers = #tpu.dot_dimension_numbers<[1], [0], [0], [1], [0, 0, 1, 1], [], []>} : vector<128x8xbf16>, vector<8x128xbf16>, vector<128x128xf32> -> vector<128x128xf32>
    %47 = arith.addf %38, %46 : vector<128x128xf32>
    %c1_i32_33 = arith.constant 1 : i32
    %48 = arith.addi %1, %c1_i32_33 : i32
    %c0_34 = arith.constant 0 : index
    %49 = arith.index_cast %48 : i32 to index
    %c2_35 = arith.constant 2 : index
    %c0_36 = arith.constant 0 : index
    %50 = vector.load %arg2[%c0_34, %49, %c2_35, %c0_36] : memref<1x18x18x8xbf16, #tpu.memory_space<vmem>>, vector<1x8x16x8xbf16>
    %51 = vector.shape_cast %50 : vector<1x8x16x8xbf16> to vector<8x16x8xbf16>
    %52 = vector.shape_cast %51 : vector<8x16x8xbf16> to vector<128x8xbf16>
    %c5 = arith.constant 5 : index
    %c0_37 = arith.constant 0 : index
    %c0_38 = arith.constant 0 : index
    %53 = vector.load %arg3[%c5, %c0_37, %c0_38] : memref<9x8x128xbf16, #tpu.memory_space<vmem>>, vector<1x8x128xbf16>
    %54 = vector.shape_cast %53 : vector<1x8x128xbf16> to vector<8x128xbf16>
    %cst_39 = arith.constant dense<0.000000e+00> : vector<128x128xf32>
    %55 = tpu.matmul %52, %54, %cst_39 {dimension_numbers = #tpu.dot_dimension_numbers<[1], [0], [0], [1], [0, 0, 1, 1], [], []>} : vector<128x8xbf16>, vector<8x128xbf16>, vector<128x128xf32> -> vector<128x128xf32>
    %56 = arith.addf %47, %55 : vector<128x128xf32>
    %c2_i32 = arith.constant 2 : i32
    %57 = arith.addi %1, %c2_i32 : i32
    %c0_40 = arith.constant 0 : index
    %58 = arith.index_cast %57 : i32 to index
    %c0_41 = arith.constant 0 : index
    %c0_42 = arith.constant 0 : index
    %59 = vector.load %arg2[%c0_40, %58, %c0_41, %c0_42] : memref<1x18x18x8xbf16, #tpu.memory_space<vmem>>, vector<1x8x16x8xbf16>
    %60 = vector.shape_cast %59 : vector<1x8x16x8xbf16> to vector<8x16x8xbf16>
    %61 = vector.shape_cast %60 : vector<8x16x8xbf16> to vector<128x8xbf16>
    %c6 = arith.constant 6 : index
    %c0_43 = arith.constant 0 : index
    %c0_44 = arith.constant 0 : index
    %62 = vector.load %arg3[%c6, %c0_43, %c0_44] : memref<9x8x128xbf16, #tpu.memory_space<vmem>>, vector<1x8x128xbf16>
    %63 = vector.shape_cast %62 : vector<1x8x128xbf16> to vector<8x128xbf16>
    %cst_45 = arith.constant dense<0.000000e+00> : vector<128x128xf32>
    %64 = tpu.matmul %61, %63, %cst_45 {dimension_numbers = #tpu.dot_dimension_numbers<[1], [0], [0], [1], [0, 0, 1, 1], [], []>} : vector<128x8xbf16>, vector<8x128xbf16>, vector<128x128xf32> -> vector<128x128xf32>
    %65 = arith.addf %56, %64 : vector<128x128xf32>
    %c2_i32_46 = arith.constant 2 : i32
    %66 = arith.addi %1, %c2_i32_46 : i32
    %c0_47 = arith.constant 0 : index
    %67 = arith.index_cast %66 : i32 to index
    %c1_48 = arith.constant 1 : index
    %c0_49 = arith.constant 0 : index
    %68 = vector.load %arg2[%c0_47, %67, %c1_48, %c0_49] : memref<1x18x18x8xbf16, #tpu.memory_space<vmem>>, vector<1x8x16x8xbf16>
    %69 = vector.shape_cast %68 : vector<1x8x16x8xbf16> to vector<8x16x8xbf16>
    %70 = vector.shape_cast %69 : vector<8x16x8xbf16> to vector<128x8xbf16>
    %c7 = arith.constant 7 : index
    %c0_50 = arith.constant 0 : index
    %c0_51 = arith.constant 0 : index
    %71 = vector.load %arg3[%c7, %c0_50, %c0_51] : memref<9x8x128xbf16, #tpu.memory_space<vmem>>, vector<1x8x128xbf16>
    %72 = vector.shape_cast %71 : vector<1x8x128xbf16> to vector<8x128xbf16>
    %cst_52 = arith.constant dense<0.000000e+00> : vector<128x128xf32>
    %73 = tpu.matmul %70, %72, %cst_52 {dimension_numbers = #tpu.dot_dimension_numbers<[1], [0], [0], [1], [0, 0, 1, 1], [], []>} : vector<128x8xbf16>, vector<8x128xbf16>, vector<128x128xf32> -> vector<128x128xf32>
    %74 = arith.addf %65, %73 : vector<128x128xf32>
    %c2_i32_53 = arith.constant 2 : i32
    %75 = arith.addi %1, %c2_i32_53 : i32
    %c0_54 = arith.constant 0 : index
    %76 = arith.index_cast %75 : i32 to index
    %c2_55 = arith.constant 2 : index
    %c0_56 = arith.constant 0 : index
    %77 = vector.load %arg2[%c0_54, %76, %c2_55, %c0_56] : memref<1x18x18x8xbf16, #tpu.memory_space<vmem>>, vector<1x8x16x8xbf16>
    %78 = vector.shape_cast %77 : vector<1x8x16x8xbf16> to vector<8x16x8xbf16>
    %79 = vector.shape_cast %78 : vector<8x16x8xbf16> to vector<128x8xbf16>
    %c8 = arith.constant 8 : index
    %c0_57 = arith.constant 0 : index
    %c0_58 = arith.constant 0 : index
    %80 = vector.load %arg3[%c8, %c0_57, %c0_58] : memref<9x8x128xbf16, #tpu.memory_space<vmem>>, vector<1x8x128xbf16>
    %81 = vector.shape_cast %80 : vector<1x8x128xbf16> to vector<8x128xbf16>
    %cst_59 = arith.constant dense<0.000000e+00> : vector<128x128xf32>
    %82 = tpu.matmul %79, %81, %cst_59 {dimension_numbers = #tpu.dot_dimension_numbers<[1], [0], [0], [1], [0, 0, 1, 1], [], []>} : vector<128x8xbf16>, vector<8x128xbf16>, vector<128x128xf32> -> vector<128x128xf32>
    %83 = arith.addf %74, %82 : vector<128x128xf32>
    %c0_60 = arith.constant 0 : index
    %c0_61 = arith.constant 0 : index
    %84 = vector.load %arg4[%c0_60, %c0_61] : memref<1x128xf32, #tpu.memory_space<vmem>>, vector<1x128xf32>
    %85 = vector.broadcast %84 : vector<1x128xf32> to vector<128x128xf32>
    %86 = arith.addf %83, %85 : vector<128x128xf32>
    %cst_62 = arith.constant 0.000000e+00 : f32
    %87 = vector.broadcast %cst_62 : f32 to vector<128x128xf32>
    %88 = arith.maximumf %86, %87 : vector<128x128xf32>
    %89 = vector.shape_cast %88 : vector<128x128xf32> to vector<1x128x128xf32>
    %90 = arith.truncf %89 : vector<1x128x128xf32> to vector<1x128x128xbf16>
    %c0_63 = arith.constant 0 : index
    %c0_64 = arith.constant 0 : index
    %c0_65 = arith.constant 0 : index
    %91 = vector.load %arg5[%c0_63, %c0_64, %c0_65] : memref<1x128x128xbf16, #tpu.memory_space<vmem>>, vector<1x128x128xbf16>
    tpu.vector_store %arg5[%c0_63, %c0_64, %c0_65], %90 {strides = array<i32>} : memref<1x128x128xbf16, #tpu.memory_space<vmem>>, vector<1x128x128xbf16>,
    return
  }
  func.func @transform_0(%arg0: i32, %arg1: i32) -> (i32, i32, i32, i32) {
    %c0_i32 = arith.constant 0 : i32
    %c0_i32_0 = arith.constant 0 : i32
    %c0_i32_1 = arith.constant 0 : i32
    %c0_i32_2 = arith.constant 0 : i32
    return %arg0, %c0_i32, %c0_i32_0, %c0_i32_1 : i32, i32, i32, i32
  }
  func.func @transform_1(%arg0: i32, %arg1: i32) -> (i32, i32, i32) {
    %c0_i32 = arith.constant 0 : i32
    %c0_i32_0 = arith.constant 0 : i32
    %c0_i32_1 = arith.constant 0 : i32
    %c0_i32_2 = arith.constant 0 : i32
    return %c0_i32, %c0_i32_0, %c0_i32_1 : i32, i32, i32
  }
  func.func @transform_2(%arg0: i32, %arg1: i32) -> (i32, i32) {
    %c0_i32 = arith.constant 0 : i32
    %c0_i32_0 = arith.constant 0 : i32
    %c0_i32_1 = arith.constant 0 : i32
    return %c0_i32, %c0_i32_0 : i32, i32
  }
  func.func @transform_3(%arg0: i32, %arg1: i32) -> (i32, i32, i32) {
    %c0_i32 = arith.constant 0 : i32
    %c0_i32_0 = arith.constant 0 : i32
    return %arg0, %arg1, %c0_i32 : i32, i32, i32
  }
}

</mosaic_0001>

<llo_original>
// kernel: tpu_custom_call.1
$region0: #{tpu_custom_call.1}
  #allocation0 [shape = 'u32[]', space=smem, size = 0x4, offset = 0x4, fixed_abs, tag = 'smem constant byte address 0x4 - core index']
  #allocation1 [shape = 'u32[144,128]{1,0:T(1,128)}', space=vmem, size = 0x12000, scoped, tag = 'internal scratch']
  %s0 = inlined_call_operand.vmem [shape: bf16[2,18,18,8], index: 0, kind: input, shape index: {}]
  %s1 = inlined_call_operand.vmem [shape: bf16[9,8,128], index: 1, kind: input, shape index: {}]
  %s2 = inlined_call_operand.vmem [shape: f32[1,128], index: 2, kind: input, shape index: {}]
  %s3 = inlined_call_operand.hbm [shape: bf16[2,256,128], index: 3, kind: output, shape index: {}]
  %s4 = sld [smem:[#allocation0]]
  $region45: #{tpu_custom_call.1} parent=0
    _
  %s6 = ssub.s32 1, %s4
  %s7 = scalar_select 0, %s6, %s4
  $region1: #{tpu_custom_call.1} parent=0
    #allocation2 [shape = 'u8[65536]{0}', space=vmem, size = 0x10000, scoped, tag = 'output window, operand 0']
    #allocation3 [shape = 's32[2]{0}', space=sflag, size = 0x8, scoped, tag = 'scoped memory for tpu_custom_call.1']
    %8 = vsyncpa [#allocation3], 0
    %s9 = scalar_lea.sflag [#allocation3], 1
    %10 = vsyncpa %s9, 0
    loop: start=0, step=1, limit=6
    $region2: #{tpu_custom_call.1} parent=1 // loop_pre_header
      _
    $region3: #{tpu_custom_call.1} parent=1 // loop_header
      %s12 = sphi 0, %s16
      %p13 = scmp.ge.s32.totalorder %s12, 6
      %s19 = sphi 0, %s31
      %s20 = sphi 0, %s27
      %s21 = sphi 0, %s19
      %s22 = sphi 0, %s20
      %s23 = sphi 0, %s21
      %s24 = sphi 0, %s22
      %s34 = sphi 0, %s36
      %s37 = sphi 0, %s34
      %s38 = sphi 0, %s37
      %s54 = sphi 0, %s38
      %s58 = sphi 0, %s58
      %s60 = sphi 0, %s58
      %s61 = sphi 0, %s60
      %s75 = sphi 0, %s61
      %s79 = sphi 0, %s79
      %s81 = sphi 0, %s79
      %s82 = sphi 0, %s81
      %s96 = sphi 0, %s82
      %s104 = sphi 0, %s106
      %s107 = sphi 0, %s104
      %s108 = sphi 0, %s107
      %s124 = sphi 0, %s108
    $region4: #{tpu_custom_call.1} parent=1 // loop_header_branch
      %15 = sbr.rel (%p13) target = $region8
    $region5: #{tpu_custom_call.1} parent=1 // loop_body
      %s17 = ssub.s32 %s12, 1
      %s18 = ssub.s32 %s12, 2
      %s25 = sadd.s32 1, %s20
      %p26 = scmp.ge.s32.totalorder %s25, 2
      %s27 = scalar_select %p26, 0, %s25
      %s28 = sadd.s32 1, %s19
      %s29 = scalar_select %p26, %s28, %s19
      %p30 = scmp.ge.s32.totalorder %s29, 2
      %s31 = scalar_select %p30, 0, %s29
      %s32 = ssub.s32 %s19, %s31
      %p33 = scmp.eq.s32.totalorder %s32, 0
      %s35 = sadd.s32 %s34, 1
      %s36 = scalar_select %p33, %s34, %s35
      %p39 = pneg %p33
      %p40 = scmp.eq.s32.totalorder %s12, 3
      %p41 = por %p39, %p40
      %p42 = scmp.ne.s32.totalorder %s34, %s37
      %p43 = scmp.eq.s32.totalorder %s12, 0
      %p44 = por %p42, %p43
      %p45 = scmp.ne.s32.totalorder %s34, %s37
      %p46 = scmp.eq.s32.totalorder %s17, 3
      %p47 = por %p45, %p46
      %p48 = scmp.ne.s32.totalorder %s37, %s38
      %p49 = scmp.eq.s32.totalorder %s17, 0
      %p50 = por %p48, %p49
      %p51 = scmp.ne.s32.totalorder %s37, %s38
      %p52 = scmp.eq.s32.totalorder %s18, 3
      %p53 = por %p51, %p52
      %p55 = scmp.ne.s32.totalorder %s38, %s54
      %p56 = scmp.eq.s32.totalorder %s18, 0
      %p57 = por %p55, %p56
      %s59 = sadd.s32 %s58, 1
      %p62 = scmp.eq.s32.totalorder %s12, 3
      %p63 = scmp.ne.s32.totalorder %s58, %s60
      %p64 = scmp.eq.s32.totalorder %s12, 0
      %p65 = por %p63, %p64
      %p66 = scmp.ne.s32.totalorder %s58, %s60
      %p67 = scmp.eq.s32.totalorder %s17, 3
      %p68 = por %p66, %p67
      %p69 = scmp.ne.s32.totalorder %s60, %s61
      %p70 = scmp.eq.s32.totalorder %s17, 0
      %p71 = por %p69, %p70
      %p72 = scmp.ne.s32.totalorder %s60, %s61
      %p73 = scmp.eq.s32.totalorder %s18, 3
      %p74 = por %p72, %p73
      %p76 = scmp.ne.s32.totalorder %s61, %s75
      %p77 = scmp.eq.s32.totalorder %s18, 0
      %p78 = por %p76, %p77
      %s80 = sadd.s32 %s79, 1
      %p83 = scmp.eq.s32.totalorder %s12, 3
      %p84 = scmp.ne.s32.totalorder %s79, %s81
      %p85 = scmp.eq.s32.totalorder %s12, 0
      %p86 = por %p84, %p85
      %p87 = scmp.ne.s32.totalorder %s79, %s81
      %p88 = scmp.eq.s32.totalorder %s17, 3
      %p89 = por %p87, %p88
      %p90 = scmp.ne.s32.totalorder %s81, %s82
      %p91 = scmp.eq.s32.totalorder %s17, 0
      %p92 = por %p90, %p91
      %p93 = scmp.ne.s32.totalorder %s81, %s82
      %p94 = scmp.eq.s32.totalorder %s18, 3
      %p95 = por %p93, %p94
      %p97 = scmp.ne.s32.totalorder %s82, %s96
      %p98 = scmp.eq.s32.totalorder %s18, 0
      %p99 = por %p97, %p98
      %s100 = ssub.s32 %s19, %s31
      %s101 = ssub.s32 %s20, %s27
      %s102 = sor.u32 %s100, %s101
      %p103 = scmp.eq.s32.totalorder %s102, 0
      %s105 = sadd.s32 %s104, 1
      %s106 = scalar_select %p103, %s104, %s105
      %p109 = pneg %p103
      %p110 = scmp.eq.s32.totalorder %s12, 3
      %p111 = por %p109, %p110
      %p112 = scmp.ne.s32.totalorder %s104, %s107
      %p113 = scmp.eq.s32.totalorder %s12, 0
      %p114 = por %p112, %p113
      %p115 = scmp.ne.s32.totalorder %s104, %s107
      %p116 = scmp.eq.s32.totalorder %s17, 3
      %p117 = por %p115, %p116
      %p118 = scmp.ne.s32.totalorder %s107, %s108
      %p119 = scmp.eq.s32.totalorder %s17, 0
      %p120 = por %p118, %p119
      %p121 = scmp.ne.s32.totalorder %s107, %s108
      %p122 = scmp.eq.s32.totalorder %s18, 3
      %p123 = por %p121, %p122
      %p125 = scmp.ne.s32.totalorder %s108, %s124
      %p126 = scmp.eq.s32.totalorder %s18, 0
      %p127 = por %p125, %p126
      %p128 = scmp.le.s32.totalorder 1, %s12
      %p129 = scmp.lt.s32.totalorder %s12, 5
      %p130 = pnand %p128, %p129
      %p131 = pneg %p130
      // Predicated region
      $region9: #{tpu_custom_call.1} parent=5 // pred_check
        _
      $region10: #{tpu_custom_call.1} parent=5 // pred_check_branch
        %133 = sbr.rel (%p130) target = $region12
      $region11: #{tpu_custom_call.1} parent=5 // pred_region
        %s134 = ssub.s32 %s12, 1
        // Predicated region
        $region13: #{tpu_custom_call.1} parent=11 // pred_check
          %p135 = pneg %p71
        $region14: #{tpu_custom_call.1} parent=11 // pred_check_branch
          %137 = sbr.rel (%p135) target = $region16
        $region15: #{tpu_custom_call.1} parent=11 // pred_region
          _
        $region16: #{tpu_custom_call.1} parent=11 // pred_fallthru
          _
        // Predicated region
        $region17: #{tpu_custom_call.1} parent=11 // pred_check
          %p138 = pneg %p92
        $region18: #{tpu_custom_call.1} parent=11 // pred_check_branch
          %140 = sbr.rel (%p138) target = $region20
        $region19: #{tpu_custom_call.1} parent=11 // pred_region
          _
        $region20: #{tpu_custom_call.1} parent=11 // pred_fallthru
          _
      $region12: #{tpu_custom_call.1} parent=5 // pred_fallthru
        _
      %p141 = scmp.lt.s32.totalorder %s12, 4
      // Predicated region
      $region21: #{tpu_custom_call.1} parent=5 // pred_check
        %p142 = pneg %p141
      $region22: #{tpu_custom_call.1} parent=5 // pred_check_branch
        %144 = sbr.rel (%p142) target = $region24
      $region23: #{tpu_custom_call.1} parent=5 // pred_region
        // Predicated region
        $region25: #{tpu_custom_call.1} parent=23 // pred_check
          %p145 = pneg %p44
        $region26: #{tpu_custom_call.1} parent=23 // pred_check_branch
          %147 = sbr.rel (%p145) target = $region28
        $region27: #{tpu_custom_call.1} parent=23 // pred_region
          %p148 = scmp.lt.s32.totalorder %s19, 1
          %s149 = scalar_select %p148, %s19, 1
          %s150 = smul.addr %s149, 54
          %s151 = smul.addr %s150, 4
          %s152 = scalar_lea.vmem %s0, %s151
        $region28: #{tpu_custom_call.1} parent=23 // pred_fallthru
          _
      $region24: #{tpu_custom_call.1} parent=5 // pred_fallthru
        _
      %p153 = scmp.le.s32.totalorder 1, %s12
      %p154 = scmp.lt.s32.totalorder %s12, 5
      %p155 = pnand %p153, %p154
      %p156 = pneg %p155
      // Predicated region
      $region29: #{tpu_custom_call.1} parent=5 // pred_check
        _
      $region30: #{tpu_custom_call.1} parent=5 // pred_check_branch
        %158 = sbr.rel (%p155) target = $region32
      $region31: #{tpu_custom_call.1} parent=5 // pred_region
        %s159 = ssub.s32 %s12, 1
        %p160 = scmp.lt.s32.totalorder %s21, 1
        %s161 = scalar_select %p160, %s21, 1
        %s162 = smul.addr %s161, 54
        %s163 = smul.addr %s162, 4
        %s164 = scalar_lea.vmem %s0, %s163
        %p165 = pneg %p50
        %p166 = pneg %p47
        %p167 = pneg %p71
        %p168 = pneg %p68
        %p169 = pneg %p92
        %p170 = pneg %p89
        %p171 = pneg %p120
        %p172 = pneg %p117
        %s173 = sand.u32 %s107, 1
        %s174 = scalar_lea.sflag [#allocation3], %s173
        %s175 = sand.u32 %s107, 1
        %s176 = smul.addr %s175, 64
        %s177 = scalar_lea.vmem [#allocation2], %s176
        %p178 = scmp.lt.s32.totalorder %s21, 1
        %s179 = scalar_select %p178, %s21, 1
        %s180 = smul.addr %s179, 54
        %s181 = smul.addr %s180, 4
        %s182 = scalar_lea.vmem %s0, %s181
        %s183 = smul.u32 16, %s22
        %s185 = smul.u32 %s22, 8
        %s186 = smul.u32 %s185, 3
        %s187 = smul.addr %s186, 4
        %s188 = scalar_lea.vmem %s182, %s187
        %v189 = vld [vmem:[%s188] sm:$0xf]
        %v190 = vld [vmem:[%s188 + $0x4] sm:$0xf]
        %v191 = vld [vmem:[%s188 + $0xc] sm:$0xf]
        %v192 = vld [vmem:[%s188 + $0x10] sm:$0xf]
        %v193 = vld [vmem:[%s188 + $0x18] sm:$0xf]
        %v194 = vld [vmem:[%s188 + $0x1c] sm:$0xf]
        %v195 = vld [vmem:[%s188 + $0x24] sm:$0xf]
        %v196 = vld [vmem:[%s188 + $0x28] sm:$0xf]
        %v197 = vld [vmem:[%s188 + $0x30] sm:$0xf]
        %v198 = vld [vmem:[%s188 + $0x34] sm:$0xf]
        %v199 = vld [vmem:[%s188 + $0x3c] sm:$0xf]
        %v200 = vld [vmem:[%s188 + $0x40] sm:$0xf]
        %v201 = vld [vmem:[%s188 + $0x48] sm:$0xf]
        %v202 = vld [vmem:[%s188 + $0x4c] sm:$0xf]
        %v203 = vld [vmem:[%s188 + $0x54] sm:$0xf]
        %v204 = vld [vmem:[%s188 + $0x58] sm:$0xf]
        %v205 = vld [vmem:[%s1] sm:$0xf]
        %v206 = vld [vmem:[%s188 + $0x8] sm:$0x1]
        %v207 = vld [vmem:[%s188 + $0x14] sm:$0x1]
        %v208 = vld [vmem:[%s188 + $0x20] sm:$0x1]
        %v209 = vld [vmem:[%s188 + $0x2c] sm:$0x1]
        %v210 = vld [vmem:[%s188 + $0x38] sm:$0x1]
        %v211 = vld [vmem:[%s188 + $0x44] sm:$0x1]
        %v212 = vld [vmem:[%s188 + $0x50] sm:$0x1]
        %v213 = vld [vmem:[%s188 + $0x5c] sm:$0x1]
        %vm214 = vsmask.f32 3328
        %vm215 = vsmask.f32 7440
        %vm216 = vmor %vm214, %vm215
        %v218 = vshrl.u32 %v189, 16
        %v220 = vrot.slane %v218, 4
        %v221 = vshll.u32 %v189, 16
        %v223 = vrot.slane %v221, 5
        %v224 = vor.u32 %v220, %v223
        %v225 = vrot.slane %v224, 4
        %v227 = vshll.u32 %v190, 16
        %v229 = vrot.slane %v227, 5
        %v230 = vsel %vm216, %v225, %v229
        %v231 = vshrl.u32 %v190, 16
        %v233 = vrot.slane %v231, 4
        %v234 = vor.u32 %v233, %v229
        %v235 = vrot.slane %v234, 4
        %v237 = vshll.u32 %v206, 16
        %v239 = vrot.slane %v237, 5
        %v240 = vsel %vm216, %v235, %v239
        %v242 = vshrl.u32 %v191, 16
        %v244 = vrot.slane %v242, 4
        %v245 = vshll.u32 %v191, 16
        %v247 = vrot.slane %v245, 5
        %v248 = vor.u32 %v244, %v247
        %v249 = vrot.slane %v248, 4
        %v251 = vshll.u32 %v192, 16
        %v253 = vrot.slane %v251, 5
        %v254 = vsel %vm216, %v249, %v253
        %v255 = vshrl.u32 %v192, 16
        %v257 = vrot.slane %v255, 4
        %v258 = vor.u32 %v257, %v253
        %v259 = vrot.slane %v258, 4
        %v261 = vshll.u32 %v207, 16
        %v263 = vrot.slane %v261, 5
        %v264 = vsel %vm216, %v259, %v263
        %v266 = vshrl.u32 %v193, 16
        %v268 = vrot.slane %v266, 4
        %v269 = vshll.u32 %v193, 16
        %v271 = vrot.slane %v269, 5
        %v272 = vor.u32 %v268, %v271
        %v273 = vrot.slane %v272, 4
        %v275 = vshll.u32 %v194, 16
        %v277 = vrot.slane %v275, 5
        %v278 = vsel %vm216, %v273, %v277
        %v279 = vshrl.u32 %v194, 16
        %v281 = vrot.slane %v279, 4
        %v282 = vor.u32 %v281, %v277
        %v283 = vrot.slane %v282, 4
        %v285 = vshll.u32 %v208, 16
        %v287 = vrot.slane %v285, 5
        %v288 = vsel %vm216, %v283, %v287
        %v290 = vshrl.u32 %v195, 16
        %v292 = vrot.slane %v290, 4
        %v293 = vshll.u32 %v195, 16
        %v295 = vrot.slane %v293, 5
        %v296 = vor.u32 %v292, %v295
        %v297 = vrot.slane %v296, 4
        %v299 = vshll.u32 %v196, 16
        %v301 = vrot.slane %v299, 5
        %v302 = vsel %vm216, %v297, %v301
        %v303 = vshrl.u32 %v196, 16
        %v305 = vrot.slane %v303, 4
        %v306 = vor.u32 %v305, %v301
        %v307 = vrot.slane %v306, 4
        %v309 = vshll.u32 %v209, 16
        %v311 = vrot.slane %v309, 5
        %v312 = vsel %vm216, %v307, %v311
        %v314 = vshrl.u32 %v197, 16
        %v316 = vrot.slane %v314, 4
        %v317 = vshll.u32 %v197, 16
        %v319 = vrot.slane %v317, 5
        %v320 = vor.u32 %v316, %v319
        %v321 = vrot.slane %v320, 4
        %v323 = vshll.u32 %v198, 16
        %v325 = vrot.slane %v323, 5
        %v326 = vsel %vm216, %v321, %v325
        %v327 = vshrl.u32 %v198, 16
        %v329 = vrot.slane %v327, 4
        %v330 = vor.u32 %v329, %v325
        %v331 = vrot.slane %v330, 4
        %v333 = vshll.u32 %v210, 16
        %v335 = vrot.slane %v333, 5
        %v336 = vsel %vm216, %v331, %v335
        %v338 = vshrl.u32 %v199, 16
        %v340 = vrot.slane %v338, 4
        %v341 = vshll.u32 %v199, 16
        %v343 = vrot.slane %v341, 5
        %v344 = vor.u32 %v340, %v343
        %v345 = vrot.slane %v344, 4
        %v347 = vshll.u32 %v200, 16
        %v349 = vrot.slane %v347, 5
        %v350 = vsel %vm216, %v345, %v349
        %v351 = vshrl.u32 %v200, 16
        %v353 = vrot.slane %v351, 4
        %v354 = vor.u32 %v353, %v349
        %v355 = vrot.slane %v354, 4
        %v357 = vshll.u32 %v211, 16
        %v359 = vrot.slane %v357, 5
        %v360 = vsel %vm216, %v355, %v359
        %v362 = vshrl.u32 %v201, 16
        %v364 = vrot.slane %v362, 4
        %v365 = vshll.u32 %v201, 16
        %v367 = vrot.slane %v365, 5
        %v368 = vor.u32 %v364, %v367
        %v369 = vrot.slane %v368, 4
        %v371 = vshll.u32 %v202, 16
        %v373 = vrot.slane %v371, 5
        %v374 = vsel %vm216, %v369, %v373
        %v375 = vshrl.u32 %v202, 16
        %v377 = vrot.slane %v375, 4
        %v378 = vor.u32 %v377, %v373
        %v379 = vrot.slane %v378, 4
        %v381 = vshll.u32 %v212, 16
        %v383 = vrot.slane %v381, 5
        %v384 = vsel %vm216, %v379, %v383
        %v386 = vshrl.u32 %v203, 16
        %v388 = vrot.slane %v386, 4
        %v389 = vshll.u32 %v203, 16
        %v391 = vrot.slane %v389, 5
        %v392 = vor.u32 %v388, %v391
        %v393 = vrot.slane %v392, 4
        %v395 = vshll.u32 %v204, 16
        %v397 = vrot.slane %v395, 5
        %v398 = vsel %vm216, %v393, %v397
        %v399 = vshrl.u32 %v204, 16
        %v401 = vrot.slane %v399, 4
        %v402 = vor.u32 %v401, %v397
        %v403 = vrot.slane %v402, 4
        %v405 = vshll.u32 %v213, 16
        %v407 = vrot.slane %v405, 5
        %v408 = vsel %vm216, %v403, %v407
        %s409 = scalar_lea.vmem %s1, 4
        %v410 = vld [vmem:[%s409] sm:$0xf]
        %v411 = vunpack.c.l.b16 %v230
        %v412 = vunpack.c.l.b16 %v240
        %v413 = vunpack.c.l.b16 %v254
        %v414 = vunpack.c.l.b16 %v264
        %v415 = vunpack.c.l.b16 %v278
        %v416 = vunpack.c.l.b16 %v288
        %v417 = vunpack.c.l.b16 %v302
        %v418 = vunpack.c.l.b16 %v312
        %v419 = vunpack.c.l.b16 %v326
        %v420 = vunpack.c.l.b16 %v336
        %v421 = vunpack.c.l.b16 %v350
        %v422 = vunpack.c.l.b16 %v360
        %v423 = vunpack.c.l.b16 %v374
        %v424 = vunpack.c.l.b16 %v384
        %v425 = vunpack.c.l.b16 %v398
        %v426 = vunpack.c.l.b16 %v408
        %v427 = vpack.c.b16 %v412, %v411
        %v428 = vpack.c.b16 %v414, %v413
        %v429 = vpack.c.b16 %v416, %v415
        %v430 = vpack.c.b16 %v418, %v417
        %v431 = vpack.c.b16 %v420, %v419
        %v432 = vpack.c.b16 %v422, %v421
        %v433 = vpack.c.b16 %v424, %v423
        %v434 = vpack.c.b16 %v426, %v425
        %vm435 = vcmask 64512
        %v437 = vsel %vm435, %v427, 0
        %v440 = vsel %vm435, %v428, 0
        %v443 = vsel %vm435, %v429, 0
        %v446 = vsel %vm435, %v430, 0
        %v449 = vsel %vm435, %v431, 0
        %v452 = vsel %vm435, %v432, 0
        %v455 = vsel %vm435, %v433, 0
        %v458 = vsel %vm435, %v434, 0
        %vm460 = vcmask 1043456
        %v462 = vsel %vm460, %v410, 0
        %464 = vmatprep.subr.bf16.mxu0 0
        %465 = vmatpush1.bf16.msra.mxu0 0
        %466 = vmatprep.subr.bf16.mxu0 0
        %467 = vmatpush1.bf16.msra.mxu0 0
        %468 = vmatprep.subr.bf16.mxu0 0
        %469 = vmatpush1.bf16.msra.mxu0 0
        %470 = vmatprep.subr.bf16.mxu0 0
        %471 = vmatpush1.bf16.msra.mxu0 0
        %472 = vmatprep.subr.bf16.mxu0 0
        %473 = vmatpush1.bf16.msra.mxu0 0
        %474 = vmatprep.subr.bf16.mxu0 0
        %475 = vmatpush1.bf16.msra.mxu0 0
        %476 = vmatprep.subr.bf16.mxu0 0
        %477 = vmatpush1.bf16.msra.mxu0 0
        %478 = vmatprep.subr.bf16.mxu0 0
        %479 = vmatpush1.bf16.msra.mxu0 %v462
        %480 = vmatprep.subr.bf16.mxu0 0
        %481 = vmatpush2.bf16.msra.mxu0 0
        %482 = vmatprep.subr.bf16.mxu0 0
        %483 = vmatpush2.bf16.msra.mxu0 0
        %484 = vmatprep.subr.bf16.mxu0 0
        %485 = vmatpush2.bf16.msra.mxu0 0
        %486 = vmatprep.subr.bf16.mxu0 0
        %487 = vmatpush2.bf16.msra.mxu0 0
        %488 = vmatprep.subr.bf16.mxu0 0
        %489 = vmatpush2.bf16.msra.mxu0 0
        %490 = vmatprep.subr.bf16.mxu0 0
        %491 = vmatpush2.bf16.msra.mxu0 0
        %492 = vmatprep.subr.bf16.mxu0 0
        %493 = vmatpush2.bf16.msra.mxu0 0
        %494 = vmatprep.subr.bf16.mxu0 0
        %495 = vmatpush2.bf16.msra.mxu0 0
        %496 = vmatprep.mubr.bf16.mxu0 0
        %497 = vmatmul.mubr.bf16.gmra.mxu0 %v437
        %v498 = vpop.f32.mrf.mxu0
        %v499 = vadd.f32 0.0, %v498
        %v500 = vpop.f32.mrf.mxu0
        %v501 = vpop.f32.mrf.mxu0
        %v502 = vadd.f32 0.0, %v501
        %v503 = vpop.f32.mrf.mxu0
        %504 = vmatprep.mubr.bf16.mxu0 0
        %505 = vmatmul.mubr.bf16.gmra.mxu0 %v440
        %v506 = vpop.f32.mrf.mxu0
        %v507 = vadd.f32 0.0, %v506
        %v508 = vpop.f32.mrf.mxu0
        %v509 = vpop.f32.mrf.mxu0
        %v510 = vadd.f32 0.0, %v509
        %v511 = vpop.f32.mrf.mxu0
        %512 = vmatprep.mubr.bf16.mxu0 0
        %513 = vmatmul.mubr.bf16.gmra.mxu0 %v443
        %v514 = vpop.f32.mrf.mxu0
        %v515 = vadd.f32 0.0, %v514
        %v516 = vpop.f32.mrf.mxu0
        %v517 = vpop.f32.mrf.mxu0
        %v518 = vadd.f32 0.0, %v517
        %v519 = vpop.f32.mrf.mxu0
        %520 = vmatprep.mubr.bf16.mxu0 0
        %521 = vmatmul.mubr.bf16.gmra.mxu0 %v446
        %v522 = vpop.f32.mrf.mxu0
        %v523 = vadd.f32 0.0, %v522
        %v524 = vpop.f32.mrf.mxu0
        %v525 = vpop.f32.mrf.mxu0
        %v526 = vadd.f32 0.0, %v525
        %v527 = vpop.f32.mrf.mxu0
        %528 = vmatprep.mubr.bf16.mxu0 0
        %529 = vmatmul.mubr.bf16.gmra.mxu0 %v449
        %v530 = vpop.f32.mrf.mxu0
        %v531 = vadd.f32 0.0, %v530
        %v532 = vpop.f32.mrf.mxu0
        %v533 = vpop.f32.mrf.mxu0
        %v534 = vadd.f32 0.0, %v533
        %v535 = vpop.f32.mrf.mxu0
        %536 = vmatprep.mubr.bf16.mxu0 0
        %537 = vmatmul.mubr.bf16.gmra.mxu0 %v452
        %v538 = vpop.f32.mrf.mxu0
        %v539 = vadd.f32 0.0, %v538
        %v540 = vpop.f32.mrf.mxu0
        %v541 = vpop.f32.mrf.mxu0
        %v542 = vadd.f32 0.0, %v541
        %v543 = vpop.f32.mrf.mxu0
        %544 = vmatprep.mubr.bf16.mxu0 0
        %545 = vmatmul.mubr.bf16.gmra.mxu0 %v455
        %v546 = vpop.f32.mrf.mxu0
        %v547 = vadd.f32 0.0, %v546
        %v548 = vpop.f32.mrf.mxu0
        %v549 = vpop.f32.mrf.mxu0
        %v550 = vadd.f32 0.0, %v549
        %v551 = vpop.f32.mrf.mxu0
        %552 = vmatprep.mubr.bf16.mxu0 0
        %553 = vmatmul.mubr.bf16.gmra.mxu0 %v458
        %v554 = vpop.f32.mrf.mxu0
        %v555 = vadd.f32 0.0, %v554
        %v556 = vpop.f32.mrf.mxu0
        %v557 = vpop.f32.mrf.mxu0
        %v558 = vadd.f32 0.0, %v557
        %v559 = vpop.f32.mrf.mxu0
        %560 = vdwg.mxu0
        %v577 = vunpack.c.l.b16 %v189
        %v578 = vunpack.c.l.b16 %v190
        %v579 = vunpack.c.l.b16 %v191
        %v580 = vunpack.c.l.b16 %v192
        %v581 = vunpack.c.l.b16 %v193
        %v582 = vunpack.c.l.b16 %v194
        %v583 = vunpack.c.l.b16 %v195
        %v584 = vunpack.c.l.b16 %v196
        %v585 = vunpack.c.l.b16 %v197
        %v586 = vunpack.c.l.b16 %v198
        %v587 = vunpack.c.l.b16 %v199
        %v588 = vunpack.c.l.b16 %v200
        %v589 = vunpack.c.l.b16 %v201
        %v590 = vunpack.c.l.b16 %v202
        %v591 = vunpack.c.l.b16 %v203
        %v592 = vunpack.c.l.b16 %v204
        %v593 = vpack.c.b16 %v578, %v577
        %v594 = vpack.c.b16 %v580, %v579
        %v595 = vpack.c.b16 %v582, %v581
        %v596 = vpack.c.b16 %v584, %v583
        %v597 = vpack.c.b16 %v586, %v585
        %v598 = vpack.c.b16 %v588, %v587
        %v599 = vpack.c.b16 %v590, %v589
        %v600 = vpack.c.b16 %v592, %v591
        %v602 = vsel %vm435, %v593, 0
        %v605 = vsel %vm435, %v594, 0
        %v608 = vsel %vm435, %v595, 0
        %v611 = vsel %vm435, %v596, 0
        %v614 = vsel %vm435, %v597, 0
        %v617 = vsel %vm435, %v598, 0
        %v620 = vsel %vm435, %v599, 0
        %v623 = vsel %vm435, %v600, 0
        %v626 = vsel %vm460, %v205, 0
        %628 = vmatprep.subr.bf16.mxu0 0
        %629 = vmatpush1.bf16.msra.mxu0 0
        %630 = vmatprep.subr.bf16.mxu0 0
        %631 = vmatpush1.bf16.msra.mxu0 0
        %632 = vmatprep.subr.bf16.mxu0 0
        %633 = vmatpush1.bf16.msra.mxu0 0
        %634 = vmatprep.subr.bf16.mxu0 0
        %635 = vmatpush1.bf16.msra.mxu0 0
        %636 = vmatprep.subr.bf16.mxu0 0
        %637 = vmatpush1.bf16.msra.mxu0 0
        %638 = vmatprep.subr.bf16.mxu0 0
        %639 = vmatpush1.bf16.msra.mxu0 0
        %640 = vmatprep.subr.bf16.mxu0 0
        %641 = vmatpush1.bf16.msra.mxu0 0
        %642 = vmatprep.subr.bf16.mxu0 0
        %643 = vmatpush1.bf16.msra.mxu0 %v626
        %644 = vmatprep.subr.bf16.mxu0 0
        %645 = vmatpush2.bf16.msra.mxu0 0
        %646 = vmatprep.subr.bf16.mxu0 0
        %647 = vmatpush2.bf16.msra.mxu0 0
        %648 = vmatprep.subr.bf16.mxu0 0
        %649 = vmatpush2.bf16.msra.mxu0 0
        %650 = vmatprep.subr.bf16.mxu0 0
        %651 = vmatpush2.bf16.msra.mxu0 0
        %652 = vmatprep.subr.bf16.mxu0 0
        %653 = vmatpush2.bf16.msra.mxu0 0
        %654 = vmatprep.subr.bf16.mxu0 0
        %655 = vmatpush2.bf16.msra.mxu0 0
        %656 = vmatprep.subr.bf16.mxu0 0
        %657 = vmatpush2.bf16.msra.mxu0 0
        %658 = vmatprep.subr.bf16.mxu0 0
        %659 = vmatpush2.bf16.msra.mxu0 0
        %660 = vmatprep.mubr.bf16.mxu0 0
        %661 = vmatmul.mubr.bf16.gmra.mxu0 %v602
        %v662 = vpop.f32.mrf.mxu0
        %v663 = vadd.f32 %v499, %v662
        %v664 = vpop.f32.mrf.mxu0
        %v665 = vpop.f32.mrf.mxu0
        %v666 = vadd.f32 %v502, %v665
        %v667 = vpop.f32.mrf.mxu0
        %668 = vmatprep.mubr.bf16.mxu0 0
        %669 = vmatmul.mubr.bf16.gmra.mxu0 %v605
        %v670 = vpop.f32.mrf.mxu0
        %v671 = vadd.f32 %v507, %v670
        %v672 = vpop.f32.mrf.mxu0
        %v673 = vpop.f32.mrf.mxu0
        %v674 = vadd.f32 %v510, %v673
        %v675 = vpop.f32.mrf.mxu0
        %676 = vmatprep.mubr.bf16.mxu0 0
        %677 = vmatmul.mubr.bf16.gmra.mxu0 %v608
        %v678 = vpop.f32.mrf.mxu0
        %v679 = vadd.f32 %v515, %v678
        %v680 = vpop.f32.mrf.mxu0
        %v681 = vpop.f32.mrf.mxu0
        %v682 = vadd.f32 %v518, %v681
        %v683 = vpop.f32.mrf.mxu0
        %684 = vmatprep.mubr.bf16.mxu0 0
        %685 = vmatmul.mubr.bf16.gmra.mxu0 %v611
        %v686 = vpop.f32.mrf.mxu0
        %v687 = vadd.f32 %v523, %v686
        %v688 = vpop.f32.mrf.mxu0
        %v689 = vpop.f32.mrf.mxu0
        %v690 = vadd.f32 %v526, %v689
        %v691 = vpop.f32.mrf.mxu0
        %692 = vmatprep.mubr.bf16.mxu0 0
        %693 = vmatmul.mubr.bf16.gmra.mxu0 %v614
        %v694 = vpop.f32.mrf.mxu0
        %v695 = vadd.f32 %v531, %v694
        %v696 = vpop.f32.mrf.mxu0
        %v697 = vpop.f32.mrf.mxu0
        %v698 = vadd.f32 %v534, %v697
        %v699 = vpop.f32.mrf.mxu0
        %700 = vmatprep.mubr.bf16.mxu0 0
        %701 = vmatmul.mubr.bf16.gmra.mxu0 %v617
        %v702 = vpop.f32.mrf.mxu0
        %v703 = vadd.f32 %v539, %v702
        %v704 = vpop.f32.mrf.mxu0
        %v705 = vpop.f32.mrf.mxu0
        %v706 = vadd.f32 %v542, %v705
        %v707 = vpop.f32.mrf.mxu0
        %708 = vmatprep.mubr.bf16.mxu0 0
        %709 = vmatmul.mubr.bf16.gmra.mxu0 %v620
        %v710 = vpop.f32.mrf.mxu0
        %v711 = vadd.f32 %v547, %v710
        %v712 = vpop.f32.mrf.mxu0
        %v713 = vpop.f32.mrf.mxu0
        %v714 = vadd.f32 %v550, %v713
        %v715 = vpop.f32.mrf.mxu0
        %716 = vmatprep.mubr.bf16.mxu0 0
        %717 = vmatmul.mubr.bf16.gmra.mxu0 %v623
        %v718 = vpop.f32.mrf.mxu0
        %v719 = vadd.f32 %v555, %v718
        %v720 = vpop.f32.mrf.mxu0
        %v721 = vpop.f32.mrf.mxu0
        %v722 = vadd.f32 %v558, %v721
        %v723 = vpop.f32.mrf.mxu0
        %724 = vdwg.mxu0
        %v725 = vld [vmem:[%s188] sm:$0xe]
        %v726 = vld [vmem:[%s188 + $0xc] sm:$0xe]
        %v727 = vld [vmem:[%s188 + $0x18] sm:$0xe]
        %v728 = vld [vmem:[%s188 + $0x24] sm:$0xe]
        %v729 = vld [vmem:[%s188 + $0x30] sm:$0xe]
        %v730 = vld [vmem:[%s188 + $0x3c] sm:$0xe]
        %v731 = vld [vmem:[%s188 + $0x48] sm:$0xe]
        %v732 = vld [vmem:[%s188 + $0x54] sm:$0xe]
        %vm749 = vcmask 1042432
        %vm750 = vcmask 1046532
        %vm751 = vmor %vm749, %vm750
        %v752 = vrot.slane %v725, 5
        %v753 = vrot.slane %v752, 4
        %v754 = vrot.slane %v190, 5
        %v755 = vsel %vm751, %v753, %v754
        %v756 = vrot.slane %v754, 4
        %v757 = vrot.slane %v206, 5
        %v758 = vsel %vm751, %v756, %v757
        %v759 = vrot.slane %v726, 5
        %v760 = vrot.slane %v759, 4
        %v761 = vrot.slane %v192, 5
        %v762 = vsel %vm751, %v760, %v761
        %v763 = vrot.slane %v761, 4
        %v764 = vrot.slane %v207, 5
        %v765 = vsel %vm751, %v763, %v764
        %v766 = vrot.slane %v727, 5
        %v767 = vrot.slane %v766, 4
        %v768 = vrot.slane %v194, 5
        %v769 = vsel %vm751, %v767, %v768
        %v770 = vrot.slane %v768, 4
        %v771 = vrot.slane %v208, 5
        %v772 = vsel %vm751, %v770, %v771
        %v773 = vrot.slane %v728, 5
        %v774 = vrot.slane %v773, 4
        %v775 = vrot.slane %v196, 5
        %v776 = vsel %vm751, %v774, %v775
        %v777 = vrot.slane %v775, 4
        %v778 = vrot.slane %v209, 5
        %v779 = vsel %vm751, %v777, %v778
        %v780 = vrot.slane %v729, 5
        %v781 = vrot.slane %v780, 4
        %v782 = vrot.slane %v198, 5
        %v783 = vsel %vm751, %v781, %v782
        %v784 = vrot.slane %v782, 4
        %v785 = vrot.slane %v210, 5
        %v786 = vsel %vm751, %v784, %v785
        %v787 = vrot.slane %v730, 5
        %v788 = vrot.slane %v787, 4
        %v789 = vrot.slane %v200, 5
        %v790 = vsel %vm751, %v788, %v789
        %v791 = vrot.slane %v789, 4
        %v792 = vrot.slane %v211, 5
        %v793 = vsel %vm751, %v791, %v792
        %v794 = vrot.slane %v731, 5
        %v795 = vrot.slane %v794, 4
        %v796 = vrot.slane %v202, 5
        %v797 = vsel %vm751, %v795, %v796
        %v798 = vrot.slane %v796, 4
        %v799 = vrot.slane %v212, 5
        %v800 = vsel %vm751, %v798, %v799
        %v801 = vrot.slane %v732, 5
        %v802 = vrot.slane %v801, 4
        %v803 = vrot.slane %v204, 5
        %v804 = vsel %vm751, %v802, %v803
        %v805 = vrot.slane %v803, 4
        %v806 = vrot.slane %v213, 5
        %v807 = vsel %vm751, %v805, %v806
        %s808 = scalar_lea.vmem %s1, 8
        %v809 = vld [vmem:[%s808] sm:$0xf]
        %v810 = vunpack.c.l.b16 %v755
        %v811 = vunpack.c.l.b16 %v758
        %v812 = vunpack.c.l.b16 %v762
        %v813 = vunpack.c.l.b16 %v765
        %v814 = vunpack.c.l.b16 %v769
        %v815 = vunpack.c.l.b16 %v772
        %v816 = vunpack.c.l.b16 %v776
        %v817 = vunpack.c.l.b16 %v779
        %v818 = vunpack.c.l.b16 %v783
        %v819 = vunpack.c.l.b16 %v786
        %v820 = vunpack.c.l.b16 %v790
        %v821 = vunpack.c.l.b16 %v793
        %v822 = vunpack.c.l.b16 %v797
        %v823 = vunpack.c.l.b16 %v800
        %v824 = vunpack.c.l.b16 %v804
        %v825 = vunpack.c.l.b16 %v807
        %v826 = vpack.c.b16 %v811, %v810
        %v827 = vpack.c.b16 %v813, %v812
        %v828 = vpack.c.b16 %v815, %v814
        %v829 = vpack.c.b16 %v817, %v816
        %v830 = vpack.c.b16 %v819, %v818
        %v831 = vpack.c.b16 %v821, %v820
        %v832 = vpack.c.b16 %v823, %v822
        %v833 = vpack.c.b16 %v825, %v824
        %v835 = vsel %vm435, %v826, 0
        %v838 = vsel %vm435, %v827, 0
        %v841 = vsel %vm435, %v828, 0
        %v844 = vsel %vm435, %v829, 0
        %v847 = vsel %vm435, %v830, 0
        %v850 = vsel %vm435, %v831, 0
        %v853 = vsel %vm435, %v832, 0
        %v856 = vsel %vm435, %v833, 0
        %v859 = vsel %vm460, %v809, 0
        %861 = vmatprep.subr.bf16.mxu0 0
        %862 = vmatpush1.bf16.msra.mxu0 0
        %863 = vmatprep.subr.bf16.mxu0 0
        %864 = vmatpush1.bf16.msra.mxu0 0
        %865 = vmatprep.subr.bf16.mxu0 0
        %866 = vmatpush1.bf16.msra.mxu0 0
        %867 = vmatprep.subr.bf16.mxu0 0
        %868 = vmatpush1.bf16.msra.mxu0 0
        %869 = vmatprep.subr.bf16.mxu0 0
        %870 = vmatpush1.bf16.msra.mxu0 0
        %871 = vmatprep.subr.bf16.mxu0 0
        %872 = vmatpush1.bf16.msra.mxu0 0
        %873 = vmatprep.subr.bf16.mxu0 0
        %874 = vmatpush1.bf16.msra.mxu0 0
        %875 = vmatprep.subr.bf16.mxu0 0
        %876 = vmatpush1.bf16.msra.mxu0 %v859
        %877 = vmatprep.subr.bf16.mxu0 0
        %878 = vmatpush2.bf16.msra.mxu0 0
        %879 = vmatprep.subr.bf16.mxu0 0
        %880 = vmatpush2.bf16.msra.mxu0 0
        %881 = vmatprep.subr.bf16.mxu0 0
        %882 = vmatpush2.bf16.msra.mxu0 0
        %883 = vmatprep.subr.bf16.mxu0 0
        %884 = vmatpush2.bf16.msra.mxu0 0
        %885 = vmatprep.subr.bf16.mxu0 0
        %886 = vmatpush2.bf16.msra.mxu0 0
        %887 = vmatprep.subr.bf16.mxu0 0
        %888 = vmatpush2.bf16.msra.mxu0 0
        %889 = vmatprep.subr.bf16.mxu0 0
        %890 = vmatpush2.bf16.msra.mxu0 0
        %891 = vmatprep.subr.bf16.mxu0 0
        %892 = vmatpush2.bf16.msra.mxu0 0
        %893 = vmatprep.mubr.bf16.mxu0 0
        %894 = vmatmul.mubr.bf16.gmra.mxu0 %v835
        %v895 = vpop.f32.mrf.mxu0
        %v896 = vadd.f32 0.0, %v895
        %v897 = vpop.f32.mrf.mxu0
        %v898 = vpop.f32.mrf.mxu0
        %v899 = vadd.f32 0.0, %v898
        %v900 = vpop.f32.mrf.mxu0
        %901 = vmatprep.mubr.bf16.mxu0 0
        %902 = vmatmul.mubr.bf16.gmra.mxu0 %v838
        %v903 = vpop.f32.mrf.mxu0
        %v904 = vadd.f32 0.0, %v903
        %v905 = vpop.f32.mrf.mxu0
        %v906 = vpop.f32.mrf.mxu0
        %v907 = vadd.f32 0.0, %v906
        %v908 = vpop.f32.mrf.mxu0
        %909 = vmatprep.mubr.bf16.mxu0 0
        %910 = vmatmul.mubr.bf16.gmra.mxu0 %v841
        %v911 = vpop.f32.mrf.mxu0
        %v912 = vadd.f32 0.0, %v911
        %v913 = vpop.f32.mrf.mxu0
        %v914 = vpop.f32.mrf.mxu0
        %v915 = vadd.f32 0.0, %v914
        %v916 = vpop.f32.mrf.mxu0
        %917 = vmatprep.mubr.bf16.mxu0 0
        %918 = vmatmul.mubr.bf16.gmra.mxu0 %v844
        %v919 = vpop.f32.mrf.mxu0
        %v920 = vadd.f32 0.0, %v919
        %v921 = vpop.f32.mrf.mxu0
        %v922 = vpop.f32.mrf.mxu0
        %v923 = vadd.f32 0.0, %v922
        %v924 = vpop.f32.mrf.mxu0
        %925 = vmatprep.mubr.bf16.mxu0 0
        %926 = vmatmul.mubr.bf16.gmra.mxu0 %v847
        %v927 = vpop.f32.mrf.mxu0
        %v928 = vadd.f32 0.0, %v927
        %v929 = vpop.f32.mrf.mxu0
        %v930 = vpop.f32.mrf.mxu0
        %v931 = vadd.f32 0.0, %v930
        %v932 = vpop.f32.mrf.mxu0
        %933 = vmatprep.mubr.bf16.mxu0 0
        %934 = vmatmul.mubr.bf16.gmra.mxu0 %v850
        %v935 = vpop.f32.mrf.mxu0
        %v936 = vadd.f32 0.0, %v935
        %v937 = vpop.f32.mrf.mxu0
        %v938 = vpop.f32.mrf.mxu0
        %v939 = vadd.f32 0.0, %v938
        %v940 = vpop.f32.mrf.mxu0
        %941 = vmatprep.mubr.bf16.mxu0 0
        %942 = vmatmul.mubr.bf16.gmra.mxu0 %v853
        %v943 = vpop.f32.mrf.mxu0
        %v944 = vadd.f32 0.0, %v943
        %v945 = vpop.f32.mrf.mxu0
        %v946 = vpop.f32.mrf.mxu0
        %v947 = vadd.f32 0.0, %v946
        %v948 = vpop.f32.mrf.mxu0
        %949 = vmatprep.mubr.bf16.mxu0 0
        %950 = vmatmul.mubr.bf16.gmra.mxu0 %v856
        %v951 = vpop.f32.mrf.mxu0
        %v952 = vadd.f32 0.0, %v951
        %v953 = vpop.f32.mrf.mxu0
        %v954 = vpop.f32.mrf.mxu0
        %v955 = vadd.f32 0.0, %v954
        %v956 = vpop.f32.mrf.mxu0
        %957 = vdwg.mxu0
        %v958 = vadd.f32 %v663, %v896
        %v959 = vadd.f32 %v666, %v899
        %v960 = vadd.f32 %v671, %v904
        %v961 = vadd.f32 %v674, %v907
        %v962 = vadd.f32 %v679, %v912
        %v963 = vadd.f32 %v682, %v915
        %v964 = vadd.f32 %v687, %v920
        %v965 = vadd.f32 %v690, %v923
        %v966 = vadd.f32 %v695, %v928
        %v967 = vadd.f32 %v698, %v931
        %v968 = vadd.f32 %v703, %v936
        %v969 = vadd.f32 %v706, %v939
        %v970 = vadd.f32 %v711, %v944
        %v971 = vadd.f32 %v714, %v947
        %v972 = vadd.f32 %v719, %v952
        %v973 = vadd.f32 %v722, %v955
        %s974 = sadd.s32 %s185, 1
        %s975 = smul.u32 %s974, 3
        %s976 = smul.addr %s975, 4
        %s977 = scalar_lea.vmem %s182, %s976
        %v978 = vld [vmem:[%s977] sm:$0xf]
        %v979 = vld [vmem:[%s977 + $0x4] sm:$0xf]
        %v980 = vld [vmem:[%s977 + $0xc] sm:$0xf]
        %v981 = vld [vmem:[%s977 + $0x10] sm:$0xf]
        %v982 = vld [vmem:[%s977 + $0x18] sm:$0xf]
        %v983 = vld [vmem:[%s977 + $0x1c] sm:$0xf]
        %v984 = vld [vmem:[%s977 + $0x24] sm:$0xf]
        %v985 = vld [vmem:[%s977 + $0x28] sm:$0xf]
        %v986 = vld [vmem:[%s977 + $0x30] sm:$0xf]
        %v987 = vld [vmem:[%s977 + $0x34] sm:$0xf]
        %v988 = vld [vmem:[%s977 + $0x3c] sm:$0xf]
        %v989 = vld [vmem:[%s977 + $0x40] sm:$0xf]
        %v990 = vld [vmem:[%s977 + $0x48] sm:$0xf]
        %v991 = vld [vmem:[%s977 + $0x4c] sm:$0xf]
        %v992 = vld [vmem:[%s977 + $0x54] sm:$0xf]
        %v993 = vld [vmem:[%s977 + $0x58] sm:$0xf]
        %s994 = scalar_lea.vmem %s1, 12
        %v995 = vld [vmem:[%s994] sm:$0xf]
        %v1012 = vunpack.c.l.b16 %v978
        %v1013 = vunpack.c.l.b16 %v979
        %v1014 = vunpack.c.l.b16 %v980
        %v1015 = vunpack.c.l.b16 %v981
        %v1016 = vunpack.c.l.b16 %v982
        %v1017 = vunpack.c.l.b16 %v983
        %v1018 = vunpack.c.l.b16 %v984
        %v1019 = vunpack.c.l.b16 %v985
        %v1020 = vunpack.c.l.b16 %v986
        %v1021 = vunpack.c.l.b16 %v987
        %v1022 = vunpack.c.l.b16 %v988
        %v1023 = vunpack.c.l.b16 %v989
        %v1024 = vunpack.c.l.b16 %v990
        %v1025 = vunpack.c.l.b16 %v991
        %v1026 = vunpack.c.l.b16 %v992
        %v1027 = vunpack.c.l.b16 %v993
        %v1028 = vpack.c.b16 %v1013, %v1012
        %v1029 = vpack.c.b16 %v1015, %v1014
        %v1030 = vpack.c.b16 %v1017, %v1016
        %v1031 = vpack.c.b16 %v1019, %v1018
        %v1032 = vpack.c.b16 %v1021, %v1020
        %v1033 = vpack.c.b16 %v1023, %v1022
        %v1034 = vpack.c.b16 %v1025, %v1024
        %v1035 = vpack.c.b16 %v1027, %v1026
        %v1037 = vsel %vm435, %v1028, 0
        %v1040 = vsel %vm435, %v1029, 0
        %v1043 = vsel %vm435, %v1030, 0
        %v1046 = vsel %vm435, %v1031, 0
        %v1049 = vsel %vm435, %v1032, 0
        %v1052 = vsel %vm435, %v1033, 0
        %v1055 = vsel %vm435, %v1034, 0
        %v1058 = vsel %vm435, %v1035, 0
        %v1061 = vsel %vm460, %v995, 0
        %1063 = vmatprep.subr.bf16.mxu0 0
        %1064 = vmatpush1.bf16.msra.mxu0 0
        %1065 = vmatprep.subr.bf16.mxu0 0
        %1066 = vmatpush1.bf16.msra.mxu0 0
        %1067 = vmatprep.subr.bf16.mxu0 0
        %1068 = vmatpush1.bf16.msra.mxu0 0
        %1069 = vmatprep.subr.bf16.mxu0 0
        %1070 = vmatpush1.bf16.msra.mxu0 0
        %1071 = vmatprep.subr.bf16.mxu0 0
        %1072 = vmatpush1.bf16.msra.mxu0 0
        %1073 = vmatprep.subr.bf16.mxu0 0
        %1074 = vmatpush1.bf16.msra.mxu0 0
        %1075 = vmatprep.subr.bf16.mxu0 0
        %1076 = vmatpush1.bf16.msra.mxu0 0
        %1077 = vmatprep.subr.bf16.mxu0 0
        %1078 = vmatpush1.bf16.msra.mxu0 %v1061
        %1079 = vmatprep.subr.bf16.mxu0 0
        %1080 = vmatpush2.bf16.msra.mxu0 0
        %1081 = vmatprep.subr.bf16.mxu0 0
        %1082 = vmatpush2.bf16.msra.mxu0 0
        %1083 = vmatprep.subr.bf16.mxu0 0
        %1084 = vmatpush2.bf16.msra.mxu0 0
        %1085 = vmatprep.subr.bf16.mxu0 0
        %1086 = vmatpush2.bf16.msra.mxu0 0
        %1087 = vmatprep.subr.bf16.mxu0 0
        %1088 = vmatpush2.bf16.msra.mxu0 0
        %1089 = vmatprep.subr.bf16.mxu0 0
        %1090 = vmatpush2.bf16.msra.mxu0 0
        %1091 = vmatprep.subr.bf16.mxu0 0
        %1092 = vmatpush2.bf16.msra.mxu0 0
        %1093 = vmatprep.subr.bf16.mxu0 0
        %1094 = vmatpush2.bf16.msra.mxu0 0
        %1095 = vmatprep.mubr.bf16.mxu0 0
        %1096 = vmatmul.mubr.bf16.gmra.mxu0 %v1037
        %v1097 = vpop.f32.mrf.mxu0
        %v1098 = vadd.f32 0.0, %v1097
        %v1099 = vpop.f32.mrf.mxu0
        %v1100 = vpop.f32.mrf.mxu0
        %v1101 = vadd.f32 0.0, %v1100
        %v1102 = vpop.f32.mrf.mxu0
        %1103 = vmatprep.mubr.bf16.mxu0 0
        %1104 = vmatmul.mubr.bf16.gmra.mxu0 %v1040
        %v1105 = vpop.f32.mrf.mxu0
        %v1106 = vadd.f32 0.0, %v1105
        %v1107 = vpop.f32.mrf.mxu0
        %v1108 = vpop.f32.mrf.mxu0
        %v1109 = vadd.f32 0.0, %v1108
        %v1110 = vpop.f32.mrf.mxu0
        %1111 = vmatprep.mubr.bf16.mxu0 0
        %1112 = vmatmul.mubr.bf16.gmra.mxu0 %v1043
        %v1113 = vpop.f32.mrf.mxu0
        %v1114 = vadd.f32 0.0, %v1113
        %v1115 = vpop.f32.mrf.mxu0
        %v1116 = vpop.f32.mrf.mxu0
        %v1117 = vadd.f32 0.0, %v1116
        %v1118 = vpop.f32.mrf.mxu0
        %1119 = vmatprep.mubr.bf16.mxu0 0
        %1120 = vmatmul.mubr.bf16.gmra.mxu0 %v1046
        %v1121 = vpop.f32.mrf.mxu0
        %v1122 = vadd.f32 0.0, %v1121
        %v1123 = vpop.f32.mrf.mxu0
        %v1124 = vpop.f32.mrf.mxu0
        %v1125 = vadd.f32 0.0, %v1124
        %v1126 = vpop.f32.mrf.mxu0
        %1127 = vmatprep.mubr.bf16.mxu0 0
        %1128 = vmatmul.mubr.bf16.gmra.mxu0 %v1049
        %v1129 = vpop.f32.mrf.mxu0
        %v1130 = vadd.f32 0.0, %v1129
        %v1131 = vpop.f32.mrf.mxu0
        %v1132 = vpop.f32.mrf.mxu0
        %v1133 = vadd.f32 0.0, %v1132
        %v1134 = vpop.f32.mrf.mxu0
        %1135 = vmatprep.mubr.bf16.mxu0 0
        %1136 = vmatmul.mubr.bf16.gmra.mxu0 %v1052
        %v1137 = vpop.f32.mrf.mxu0
        %v1138 = vadd.f32 0.0, %v1137
        %v1139 = vpop.f32.mrf.mxu0
        %v1140 = vpop.f32.mrf.mxu0
        %v1141 = vadd.f32 0.0, %v1140
        %v1142 = vpop.f32.mrf.mxu0
        %1143 = vmatprep.mubr.bf16.mxu0 0
        %1144 = vmatmul.mubr.bf16.gmra.mxu0 %v1055
        %v1145 = vpop.f32.mrf.mxu0
        %v1146 = vadd.f32 0.0, %v1145
        %v1147 = vpop.f32.mrf.mxu0
        %v1148 = vpop.f32.mrf.mxu0
        %v1149 = vadd.f32 0.0, %v1148
        %v1150 = vpop.f32.mrf.mxu0
        %1151 = vmatprep.mubr.bf16.mxu0 0
        %1152 = vmatmul.mubr.bf16.gmra.mxu0 %v1058
        %v1153 = vpop.f32.mrf.mxu0
        %v1154 = vadd.f32 0.0, %v1153
        %v1155 = vpop.f32.mrf.mxu0
        %v1156 = vpop.f32.mrf.mxu0
        %v1157 = vadd.f32 0.0, %v1156
        %v1158 = vpop.f32.mrf.mxu0
        %1159 = vdwg.mxu0
        %v1160 = vadd.f32 %v958, %v1098
        %v1161 = vadd.f32 %v959, %v1101
        %v1162 = vadd.f32 %v960, %v1106
        %v1163 = vadd.f32 %v961, %v1109
        %v1164 = vadd.f32 %v962, %v1114
        %v1165 = vadd.f32 %v963, %v1117
        %v1166 = vadd.f32 %v964, %v1122
        %v1167 = vadd.f32 %v965, %v1125
        %v1168 = vadd.f32 %v966, %v1130
        %v1169 = vadd.f32 %v967, %v1133
        %v1170 = vadd.f32 %v968, %v1138
        %v1171 = vadd.f32 %v969, %v1141
        %v1172 = vadd.f32 %v970, %v1146
        %v1173 = vadd.f32 %v971, %v1149
        %v1174 = vadd.f32 %v972, %v1154
        %v1175 = vadd.f32 %v973, %v1157
        %v1176 = vld [vmem:[%s977] sm:$0xf]
        %v1177 = vld [vmem:[%s977 + $0x4] sm:$0xf]
        %v1178 = vld [vmem:[%s977 + $0x8] sm:$0x1]
        %v1179 = vld [vmem:[%s977 + $0xc] sm:$0xf]
        %v1180 = vld [vmem:[%s977 + $0x10] sm:$0xf]
        %v1181 = vld [vmem:[%s977 + $0x14] sm:$0x1]
        %v1182 = vld [vmem:[%s977 + $0x18] sm:$0xf]
        %v1183 = vld [vmem:[%s977 + $0x1c] sm:$0xf]
        %v1184 = vld [vmem:[%s977 + $0x20] sm:$0x1]
        %v1185 = vld [vmem:[%s977 + $0x24] sm:$0xf]
        %v1186 = vld [vmem:[%s977 + $0x28] sm:$0xf]
        %v1187 = vld [vmem:[%s977 + $0x2c] sm:$0x1]
        %v1188 = vld [vmem:[%s977 + $0x30] sm:$0xf]
        %v1189 = vld [vmem:[%s977 + $0x34] sm:$0xf]
        %v1190 = vld [vmem:[%s977 + $0x38] sm:$0x1]
        %v1191 = vld [vmem:[%s977 + $0x3c] sm:$0xf]
        %v1192 = vld [vmem:[%s977 + $0x40] sm:$0xf]
        %v1193 = vld [vmem:[%s977 + $0x44] sm:$0x1]
        %v1194 = vld [vmem:[%s977 + $0x48] sm:$0xf]
        %v1195 = vld [vmem:[%s977 + $0x4c] sm:$0xf]
        %v1196 = vld [vmem:[%s977 + $0x50] sm:$0x1]
        %v1197 = vld [vmem:[%s977 + $0x54] sm:$0xf]
        %v1198 = vld [vmem:[%s977 + $0x58] sm:$0xf]
        %v1199 = vld [vmem:[%s977 + $0x5c] sm:$0x1]
        %v1201 = vshrl.u32 %v1176, 16
        %v1203 = vrot.slane %v1201, 4
        %v1204 = vshll.u32 %v1176, 16
        %v1206 = vrot.slane %v1204, 5
        %v1207 = vor.u32 %v1203, %v1206
        %v1208 = vrot.slane %v1207, 4
        %v1210 = vshll.u32 %v1177, 16
        %v1212 = vrot.slane %v1210, 5
        %v1213 = vsel %vm216, %v1208, %v1212
        %v1214 = vshrl.u32 %v1177, 16
        %v1216 = vrot.slane %v1214, 4
        %v1217 = vor.u32 %v1216, %v1212
        %v1218 = vrot.slane %v1217, 4
        %v1220 = vshll.u32 %v1178, 16
        %v1222 = vrot.slane %v1220, 5
        %v1223 = vsel %vm216, %v1218, %v1222
        %v1225 = vshrl.u32 %v1179, 16
        %v1227 = vrot.slane %v1225, 4
        %v1228 = vshll.u32 %v1179, 16
        %v1230 = vrot.slane %v1228, 5
        %v1231 = vor.u32 %v1227, %v1230
        %v1232 = vrot.slane %v1231, 4
        %v1234 = vshll.u32 %v1180, 16
        %v1236 = vrot.slane %v1234, 5
        %v1237 = vsel %vm216, %v1232, %v1236
        %v1238 = vshrl.u32 %v1180, 16
        %v1240 = vrot.slane %v1238, 4
        %v1241 = vor.u32 %v1240, %v1236
        %v1242 = vrot.slane %v1241, 4
        %v1244 = vshll.u32 %v1181, 16
        %v1246 = vrot.slane %v1244, 5
        %v1247 = vsel %vm216, %v1242, %v1246
        %v1249 = vshrl.u32 %v1182, 16
        %v1251 = vrot.slane %v1249, 4
        %v1252 = vshll.u32 %v1182, 16
        %v1254 = vrot.slane %v1252, 5
        %v1255 = vor.u32 %v1251, %v1254
        %v1256 = vrot.slane %v1255, 4
        %v1258 = vshll.u32 %v1183, 16
        %v1260 = vrot.slane %v1258, 5
        %v1261 = vsel %vm216, %v1256, %v1260
        %v1262 = vshrl.u32 %v1183, 16
        %v1264 = vrot.slane %v1262, 4
        %v1265 = vor.u32 %v1264, %v1260
        %v1266 = vrot.slane %v1265, 4
        %v1268 = vshll.u32 %v1184, 16
        %v1270 = vrot.slane %v1268, 5
        %v1271 = vsel %vm216, %v1266, %v1270
        %v1273 = vshrl.u32 %v1185, 16
        %v1275 = vrot.slane %v1273, 4
        %v1276 = vshll.u32 %v1185, 16
        %v1278 = vrot.slane %v1276, 5
        %v1279 = vor.u32 %v1275, %v1278
        %v1280 = vrot.slane %v1279, 4
        %v1282 = vshll.u32 %v1186, 16
        %v1284 = vrot.slane %v1282, 5
        %v1285 = vsel %vm216, %v1280, %v1284
        %v1286 = vshrl.u32 %v1186, 16
        %v1288 = vrot.slane %v1286, 4
        %v1289 = vor.u32 %v1288, %v1284
        %v1290 = vrot.slane %v1289, 4
        %v1292 = vshll.u32 %v1187, 16
        %v1294 = vrot.slane %v1292, 5
        %v1295 = vsel %vm216, %v1290, %v1294
        %v1297 = vshrl.u32 %v1188, 16
        %v1299 = vrot.slane %v1297, 4
        %v1300 = vshll.u32 %v1188, 16
        %v1302 = vrot.slane %v1300, 5
        %v1303 = vor.u32 %v1299, %v1302
        %v1304 = vrot.slane %v1303, 4
        %v1306 = vshll.u32 %v1189, 16
        %v1308 = vrot.slane %v1306, 5
        %v1309 = vsel %vm216, %v1304, %v1308
        %v1310 = vshrl.u32 %v1189, 16
        %v1312 = vrot.slane %v1310, 4
        %v1313 = vor.u32 %v1312, %v1308
        %v1314 = vrot.slane %v1313, 4
        %v1316 = vshll.u32 %v1190, 16
        %v1318 = vrot.slane %v1316, 5
        %v1319 = vsel %vm216, %v1314, %v1318
        %v1321 = vshrl.u32 %v1191, 16
        %v1323 = vrot.slane %v1321, 4
        %v1324 = vshll.u32 %v1191, 16
        %v1326 = vrot.slane %v1324, 5
        %v1327 = vor.u32 %v1323, %v1326
        %v1328 = vrot.slane %v1327, 4
        %v1330 = vshll.u32 %v1192, 16
        %v1332 = vrot.slane %v1330, 5
        %v1333 = vsel %vm216, %v1328, %v1332
        %v1334 = vshrl.u32 %v1192, 16
        %v1336 = vrot.slane %v1334, 4
        %v1337 = vor.u32 %v1336, %v1332
        %v1338 = vrot.slane %v1337, 4
        %v1340 = vshll.u32 %v1193, 16
        %v1342 = vrot.slane %v1340, 5
        %v1343 = vsel %vm216, %v1338, %v1342
        %v1345 = vshrl.u32 %v1194, 16
        %v1347 = vrot.slane %v1345, 4
        %v1348 = vshll.u32 %v1194, 16
        %v1350 = vrot.slane %v1348, 5
        %v1351 = vor.u32 %v1347, %v1350
        %v1352 = vrot.slane %v1351, 4
        %v1354 = vshll.u32 %v1195, 16
        %v1356 = vrot.slane %v1354, 5
        %v1357 = vsel %vm216, %v1352, %v1356
        %v1358 = vshrl.u32 %v1195, 16
        %v1360 = vrot.slane %v1358, 4
        %v1361 = vor.u32 %v1360, %v1356
        %v1362 = vrot.slane %v1361, 4
        %v1364 = vshll.u32 %v1196, 16
        %v1366 = vrot.slane %v1364, 5
        %v1367 = vsel %vm216, %v1362, %v1366
        %v1369 = vshrl.u32 %v1197, 16
        %v1371 = vrot.slane %v1369, 4
        %v1372 = vshll.u32 %v1197, 16
        %v1374 = vrot.slane %v1372, 5
        %v1375 = vor.u32 %v1371, %v1374
        %v1376 = vrot.slane %v1375, 4
        %v1378 = vshll.u32 %v1198, 16
        %v1380 = vrot.slane %v1378, 5
        %v1381 = vsel %vm216, %v1376, %v1380
        %v1382 = vshrl.u32 %v1198, 16
        %v1384 = vrot.slane %v1382, 4
        %v1385 = vor.u32 %v1384, %v1380
        %v1386 = vrot.slane %v1385, 4
        %v1388 = vshll.u32 %v1199, 16
        %v1390 = vrot.slane %v1388, 5
        %v1391 = vsel %vm216, %v1386, %v1390
        %s1392 = scalar_lea.vmem %s1, 16
        %v1393 = vld [vmem:[%s1392] sm:$0xf]
        %v1394 = vunpack.c.l.b16 %v1213
        %v1395 = vunpack.c.l.b16 %v1223
        %v1396 = vunpack.c.l.b16 %v1237
        %v1397 = vunpack.c.l.b16 %v1247
        %v1398 = vunpack.c.l.b16 %v1261
        %v1399 = vunpack.c.l.b16 %v1271
        %v1400 = vunpack.c.l.b16 %v1285
        %v1401 = vunpack.c.l.b16 %v1295
        %v1402 = vunpack.c.l.b16 %v1309
        %v1403 = vunpack.c.l.b16 %v1319
        %v1404 = vunpack.c.l.b16 %v1333
        %v1405 = vunpack.c.l.b16 %v1343
        %v1406 = vunpack.c.l.b16 %v1357
        %v1407 = vunpack.c.l.b16 %v1367
        %v1408 = vunpack.c.l.b16 %v1381
        %v1409 = vunpack.c.l.b16 %v1391
        %v1410 = vpack.c.b16 %v1395, %v1394
        %v1411 = vpack.c.b16 %v1397, %v1396
        %v1412 = vpack.c.b16 %v1399, %v1398
        %v1413 = vpack.c.b16 %v1401, %v1400
        %v1414 = vpack.c.b16 %v1403, %v1402
        %v1415 = vpack.c.b16 %v1405, %v1404
        %v1416 = vpack.c.b16 %v1407, %v1406
        %v1417 = vpack.c.b16 %v1409, %v1408
        %v1419 = vsel %vm435, %v1410, 0
        %v1422 = vsel %vm435, %v1411, 0
        %v1425 = vsel %vm435, %v1412, 0
        %v1428 = vsel %vm435, %v1413, 0
        %v1431 = vsel %vm435, %v1414, 0
        %v1434 = vsel %vm435, %v1415, 0
        %v1437 = vsel %vm435, %v1416, 0
        %v1440 = vsel %vm435, %v1417, 0
        %v1443 = vsel %vm460, %v1393, 0
        %1445 = vmatprep.subr.bf16.mxu0 0
        %1446 = vmatpush1.bf16.msra.mxu0 0
        %1447 = vmatprep.subr.bf16.mxu0 0
        %1448 = vmatpush1.bf16.msra.mxu0 0
        %1449 = vmatprep.subr.bf16.mxu0 0
        %1450 = vmatpush1.bf16.msra.mxu0 0
        %1451 = vmatprep.subr.bf16.mxu0 0
        %1452 = vmatpush1.bf16.msra.mxu0 0
        %1453 = vmatprep.subr.bf16.mxu0 0
        %1454 = vmatpush1.bf16.msra.mxu0 0
        %1455 = vmatprep.subr.bf16.mxu0 0
        %1456 = vmatpush1.bf16.msra.mxu0 0
        %1457 = vmatprep.subr.bf16.mxu0 0
        %1458 = vmatpush1.bf16.msra.mxu0 0
        %1459 = vmatprep.subr.bf16.mxu0 0
        %1460 = vmatpush1.bf16.msra.mxu0 %v1443
        %1461 = vmatprep.subr.bf16.mxu0 0
        %1462 = vmatpush2.bf16.msra.mxu0 0
        %1463 = vmatprep.subr.bf16.mxu0 0
        %1464 = vmatpush2.bf16.msra.mxu0 0
        %1465 = vmatprep.subr.bf16.mxu0 0
        %1466 = vmatpush2.bf16.msra.mxu0 0
        %1467 = vmatprep.subr.bf16.mxu0 0
        %1468 = vmatpush2.bf16.msra.mxu0 0
        %1469 = vmatprep.subr.bf16.mxu0 0
        %1470 = vmatpush2.bf16.msra.mxu0 0
        %1471 = vmatprep.subr.bf16.mxu0 0
        %1472 = vmatpush2.bf16.msra.mxu0 0
        %1473 = vmatprep.subr.bf16.mxu0 0
        %1474 = vmatpush2.bf16.msra.mxu0 0
        %1475 = vmatprep.subr.bf16.mxu0 0
        %1476 = vmatpush2.bf16.msra.mxu0 0
        %1477 = vmatprep.mubr.bf16.mxu0 0
        %1478 = vmatmul.mubr.bf16.gmra.mxu0 %v1419
        %v1479 = vpop.f32.mrf.mxu0
        %v1480 = vadd.f32 0.0, %v1479
        %v1481 = vpop.f32.mrf.mxu0
        %v1482 = vpop.f32.mrf.mxu0
        %v1483 = vadd.f32 0.0, %v1482
        %v1484 = vpop.f32.mrf.mxu0
        %1485 = vmatprep.mubr.bf16.mxu0 0
        %1486 = vmatmul.mubr.bf16.gmra.mxu0 %v1422
        %v1487 = vpop.f32.mrf.mxu0
        %v1488 = vadd.f32 0.0, %v1487
        %v1489 = vpop.f32.mrf.mxu0
        %v1490 = vpop.f32.mrf.mxu0
        %v1491 = vadd.f32 0.0, %v1490
        %v1492 = vpop.f32.mrf.mxu0
        %1493 = vmatprep.mubr.bf16.mxu0 0
        %1494 = vmatmul.mubr.bf16.gmra.mxu0 %v1425
        %v1495 = vpop.f32.mrf.mxu0
        %v1496 = vadd.f32 0.0, %v1495
        %v1497 = vpop.f32.mrf.mxu0
        %v1498 = vpop.f32.mrf.mxu0
        %v1499 = vadd.f32 0.0, %v1498
        %v1500 = vpop.f32.mrf.mxu0
        %1501 = vmatprep.mubr.bf16.mxu0 0
        %1502 = vmatmul.mubr.bf16.gmra.mxu0 %v1428
        %v1503 = vpop.f32.mrf.mxu0
        %v1504 = vadd.f32 0.0, %v1503
        %v1505 = vpop.f32.mrf.mxu0
        %v1506 = vpop.f32.mrf.mxu0
        %v1507 = vadd.f32 0.0, %v1506
        %v1508 = vpop.f32.mrf.mxu0
        %1509 = vmatprep.mubr.bf16.mxu0 0
        %1510 = vmatmul.mubr.bf16.gmra.mxu0 %v1431
        %v1511 = vpop.f32.mrf.mxu0
        %v1512 = vadd.f32 0.0, %v1511
        %v1513 = vpop.f32.mrf.mxu0
        %v1514 = vpop.f32.mrf.mxu0
        %v1515 = vadd.f32 0.0, %v1514
        %v1516 = vpop.f32.mrf.mxu0
        %1517 = vmatprep.mubr.bf16.mxu0 0
        %1518 = vmatmul.mubr.bf16.gmra.mxu0 %v1434
        %v1519 = vpop.f32.mrf.mxu0
        %v1520 = vadd.f32 0.0, %v1519
        %v1521 = vpop.f32.mrf.mxu0
        %v1522 = vpop.f32.mrf.mxu0
        %v1523 = vadd.f32 0.0, %v1522
        %v1524 = vpop.f32.mrf.mxu0
        %1525 = vmatprep.mubr.bf16.mxu0 0
        %1526 = vmatmul.mubr.bf16.gmra.mxu0 %v1437
        %v1527 = vpop.f32.mrf.mxu0
        %v1528 = vadd.f32 0.0, %v1527
        %v1529 = vpop.f32.mrf.mxu0
        %v1530 = vpop.f32.mrf.mxu0
        %v1531 = vadd.f32 0.0, %v1530
        %v1532 = vpop.f32.mrf.mxu0
        %1533 = vmatprep.mubr.bf16.mxu0 0
        %1534 = vmatmul.mubr.bf16.gmra.mxu0 %v1440
        %v1535 = vpop.f32.mrf.mxu0
        %v1536 = vadd.f32 0.0, %v1535
        %v1537 = vpop.f32.mrf.mxu0
        %v1538 = vpop.f32.mrf.mxu0
        %v1539 = vadd.f32 0.0, %v1538
        %v1540 = vpop.f32.mrf.mxu0
        %1541 = vdwg.mxu0
        %v1542 = vadd.f32 %v1160, %v1480
        %v1543 = vadd.f32 %v1161, %v1483
        %v1544 = vadd.f32 %v1162, %v1488
        %v1545 = vadd.f32 %v1163, %v1491
        %v1546 = vadd.f32 %v1164, %v1496
        %v1547 = vadd.f32 %v1165, %v1499
        %v1548 = vadd.f32 %v1166, %v1504
        %v1549 = vadd.f32 %v1167, %v1507
        %v1550 = vadd.f32 %v1168, %v1512
        %v1551 = vadd.f32 %v1169, %v1515
        %v1552 = vadd.f32 %v1170, %v1520
        %v1553 = vadd.f32 %v1171, %v1523
        %v1554 = vadd.f32 %v1172, %v1528
        %v1555 = vadd.f32 %v1173, %v1531
        %v1556 = vadd.f32 %v1174, %v1536
        %v1557 = vadd.f32 %v1175, %v1539
        %v1558 = vld [vmem:[%s977] sm:$0xe]
        %v1559 = vld [vmem:[%s977 + $0xc] sm:$0xe]
        %v1560 = vld [vmem:[%s977 + $0x18] sm:$0xe]
        %v1561 = vld [vmem:[%s977 + $0x24] sm:$0xe]
        %v1562 = vld [vmem:[%s977 + $0x30] sm:$0xe]
        %v1563 = vld [vmem:[%s977 + $0x3c] sm:$0xe]
        %v1564 = vld [vmem:[%s977 + $0x48] sm:$0xe]
        %v1565 = vld [vmem:[%s977 + $0x54] sm:$0xe]
        %v1590 = vrot.slane %v1558, 5
        %v1591 = vrot.slane %v1590, 4
        %v1592 = vrot.slane %v1177, 5
        %v1593 = vsel %vm751, %v1591, %v1592
        %v1594 = vrot.slane %v1592, 4
        %v1595 = vrot.slane %v1178, 5
        %v1596 = vsel %vm751, %v1594, %v1595
        %v1597 = vrot.slane %v1559, 5
        %v1598 = vrot.slane %v1597, 4
        %v1599 = vrot.slane %v1180, 5
        %v1600 = vsel %vm751, %v1598, %v1599
        %v1601 = vrot.slane %v1599, 4
        %v1602 = vrot.slane %v1181, 5
        %v1603 = vsel %vm751, %v1601, %v1602
        %v1604 = vrot.slane %v1560, 5
        %v1605 = vrot.slane %v1604, 4
        %v1606 = vrot.slane %v1183, 5
        %v1607 = vsel %vm751, %v1605, %v1606
        %v1608 = vrot.slane %v1606, 4
        %v1609 = vrot.slane %v1184, 5
        %v1610 = vsel %vm751, %v1608, %v1609
        %v1611 = vrot.slane %v1561, 5
        %v1612 = vrot.slane %v1611, 4
        %v1613 = vrot.slane %v1186, 5
        %v1614 = vsel %vm751, %v1612, %v1613
        %v1615 = vrot.slane %v1613, 4
        %v1616 = vrot.slane %v1187, 5
        %v1617 = vsel %vm751, %v1615, %v1616
        %v1618 = vrot.slane %v1562, 5
        %v1619 = vrot.slane %v1618, 4
        %v1620 = vrot.slane %v1189, 5
        %v1621 = vsel %vm751, %v1619, %v1620
        %v1622 = vrot.slane %v1620, 4
        %v1623 = vrot.slane %v1190, 5
        %v1624 = vsel %vm751, %v1622, %v1623
        %v1625 = vrot.slane %v1563, 5
        %v1626 = vrot.slane %v1625, 4
        %v1627 = vrot.slane %v1192, 5
        %v1628 = vsel %vm751, %v1626, %v1627
        %v1629 = vrot.slane %v1627, 4
        %v1630 = vrot.slane %v1193, 5
        %v1631 = vsel %vm751, %v1629, %v1630
        %v1632 = vrot.slane %v1564, 5
        %v1633 = vrot.slane %v1632, 4
        %v1634 = vrot.slane %v1195, 5
        %v1635 = vsel %vm751, %v1633, %v1634
        %v1636 = vrot.slane %v1634, 4
        %v1637 = vrot.slane %v1196, 5
        %v1638 = vsel %vm751, %v1636, %v1637
        %v1639 = vrot.slane %v1565, 5
        %v1640 = vrot.slane %v1639, 4
        %v1641 = vrot.slane %v1198, 5
        %v1642 = vsel %vm751, %v1640, %v1641
        %v1643 = vrot.slane %v1641, 4
        %v1644 = vrot.slane %v1199, 5
        %v1645 = vsel %vm751, %v1643, %v1644
        %s1646 = scalar_lea.vmem %s1, 20
        %v1647 = vld [vmem:[%s1646] sm:$0xf]
        %v1648 = vunpack.c.l.b16 %v1593
        %v1649 = vunpack.c.l.b16 %v1596
        %v1650 = vunpack.c.l.b16 %v1600
        %v1651 = vunpack.c.l.b16 %v1603
        %v1652 = vunpack.c.l.b16 %v1607
        %v1653 = vunpack.c.l.b16 %v1610
        %v1654 = vunpack.c.l.b16 %v1614
        %v1655 = vunpack.c.l.b16 %v1617
        %v1656 = vunpack.c.l.b16 %v1621
        %v1657 = vunpack.c.l.b16 %v1624
        %v1658 = vunpack.c.l.b16 %v1628
        %v1659 = vunpack.c.l.b16 %v1631
        %v1660 = vunpack.c.l.b16 %v1635
        %v1661 = vunpack.c.l.b16 %v1638
        %v1662 = vunpack.c.l.b16 %v1642
        %v1663 = vunpack.c.l.b16 %v1645
        %v1664 = vpack.c.b16 %v1649, %v1648
        %v1665 = vpack.c.b16 %v1651, %v1650
        %v1666 = vpack.c.b16 %v1653, %v1652
        %v1667 = vpack.c.b16 %v1655, %v1654
        %v1668 = vpack.c.b16 %v1657, %v1656
        %v1669 = vpack.c.b16 %v1659, %v1658
        %v1670 = vpack.c.b16 %v1661, %v1660
        %v1671 = vpack.c.b16 %v1663, %v1662
        %v1673 = vsel %vm435, %v1664, 0
        %v1676 = vsel %vm435, %v1665, 0
        %v1679 = vsel %vm435, %v1666, 0
        %v1682 = vsel %vm435, %v1667, 0
        %v1685 = vsel %vm435, %v1668, 0
        %v1688 = vsel %vm435, %v1669, 0
        %v1691 = vsel %vm435, %v1670, 0
        %v1694 = vsel %vm435, %v1671, 0
        %v1697 = vsel %vm460, %v1647, 0
        %1699 = vmatprep.subr.bf16.mxu0 0
        %1700 = vmatpush1.bf16.msra.mxu0 0
        %1701 = vmatprep.subr.bf16.mxu0 0
        %1702 = vmatpush1.bf16.msra.mxu0 0
        %1703 = vmatprep.subr.bf16.mxu0 0
        %1704 = vmatpush1.bf16.msra.mxu0 0
        %1705 = vmatprep.subr.bf16.mxu0 0
        %1706 = vmatpush1.bf16.msra.mxu0 0
        %1707 = vmatprep.subr.bf16.mxu0 0
        %1708 = vmatpush1.bf16.msra.mxu0 0
        %1709 = vmatprep.subr.bf16.mxu0 0
        %1710 = vmatpush1.bf16.msra.mxu0 0
        %1711 = vmatprep.subr.bf16.mxu0 0
        %1712 = vmatpush1.bf16.msra.mxu0 0
        %1713 = vmatprep.subr.bf16.mxu0 0
        %1714 = vmatpush1.bf16.msra.mxu0 %v1697
        %1715 = vmatprep.subr.bf16.mxu0 0
        %1716 = vmatpush2.bf16.msra.mxu0 0
        %1717 = vmatprep.subr.bf16.mxu0 0
        %1718 = vmatpush2.bf16.msra.mxu0 0
        %1719 = vmatprep.subr.bf16.mxu0 0
        %1720 = vmatpush2.bf16.msra.mxu0 0
        %1721 = vmatprep.subr.bf16.mxu0 0
        %1722 = vmatpush2.bf16.msra.mxu0 0
        %1723 = vmatprep.subr.bf16.mxu0 0
        %1724 = vmatpush2.bf16.msra.mxu0 0
        %1725 = vmatprep.subr.bf16.mxu0 0
        %1726 = vmatpush2.bf16.msra.mxu0 0
        %1727 = vmatprep.subr.bf16.mxu0 0
        %1728 = vmatpush2.bf16.msra.mxu0 0
        %1729 = vmatprep.subr.bf16.mxu0 0
        %1730 = vmatpush2.bf16.msra.mxu0 0
        %1731 = vmatprep.mubr.bf16.mxu0 0
        %1732 = vmatmul.mubr.bf16.gmra.mxu0 %v1673
        %v1733 = vpop.f32.mrf.mxu0
        %v1734 = vadd.f32 0.0, %v1733
        %v1735 = vpop.f32.mrf.mxu0
        %v1736 = vpop.f32.mrf.mxu0
        %v1737 = vadd.f32 0.0, %v1736
        %v1738 = vpop.f32.mrf.mxu0
        %1739 = vmatprep.mubr.bf16.mxu0 0
        %1740 = vmatmul.mubr.bf16.gmra.mxu0 %v1676
        %v1741 = vpop.f32.mrf.mxu0
        %v1742 = vadd.f32 0.0, %v1741
        %v1743 = vpop.f32.mrf.mxu0
        %v1744 = vpop.f32.mrf.mxu0
        %v1745 = vadd.f32 0.0, %v1744
        %v1746 = vpop.f32.mrf.mxu0
        %1747 = vmatprep.mubr.bf16.mxu0 0
        %1748 = vmatmul.mubr.bf16.gmra.mxu0 %v1679
        %v1749 = vpop.f32.mrf.mxu0
        %v1750 = vadd.f32 0.0, %v1749
        %v1751 = vpop.f32.mrf.mxu0
        %v1752 = vpop.f32.mrf.mxu0
        %v1753 = vadd.f32 0.0, %v1752
        %v1754 = vpop.f32.mrf.mxu0
        %1755 = vmatprep.mubr.bf16.mxu0 0
        %1756 = vmatmul.mubr.bf16.gmra.mxu0 %v1682
        %v1757 = vpop.f32.mrf.mxu0
        %v1758 = vadd.f32 0.0, %v1757
        %v1759 = vpop.f32.mrf.mxu0
        %v1760 = vpop.f32.mrf.mxu0
        %v1761 = vadd.f32 0.0, %v1760
        %v1762 = vpop.f32.mrf.mxu0
        %1763 = vmatprep.mubr.bf16.mxu0 0
        %1764 = vmatmul.mubr.bf16.gmra.mxu0 %v1685
        %v1765 = vpop.f32.mrf.mxu0
        %v1766 = vadd.f32 0.0, %v1765
        %v1767 = vpop.f32.mrf.mxu0
        %v1768 = vpop.f32.mrf.mxu0
        %v1769 = vadd.f32 0.0, %v1768
        %v1770 = vpop.f32.mrf.mxu0
        %1771 = vmatprep.mubr.bf16.mxu0 0
        %1772 = vmatmul.mubr.bf16.gmra.mxu0 %v1688
        %v1773 = vpop.f32.mrf.mxu0
        %v1774 = vadd.f32 0.0, %v1773
        %v1775 = vpop.f32.mrf.mxu0
        %v1776 = vpop.f32.mrf.mxu0
        %v1777 = vadd.f32 0.0, %v1776
        %v1778 = vpop.f32.mrf.mxu0
        %1779 = vmatprep.mubr.bf16.mxu0 0
        %1780 = vmatmul.mubr.bf16.gmra.mxu0 %v1691
        %v1781 = vpop.f32.mrf.mxu0
        %v1782 = vadd.f32 0.0, %v1781
        %v1783 = vpop.f32.mrf.mxu0
        %v1784 = vpop.f32.mrf.mxu0
        %v1785 = vadd.f32 0.0, %v1784
        %v1786 = vpop.f32.mrf.mxu0
        %1787 = vmatprep.mubr.bf16.mxu0 0
        %1788 = vmatmul.mubr.bf16.gmra.mxu0 %v1694
        %v1789 = vpop.f32.mrf.mxu0
        %v1790 = vadd.f32 0.0, %v1789
        %v1791 = vpop.f32.mrf.mxu0
        %v1792 = vpop.f32.mrf.mxu0
        %v1793 = vadd.f32 0.0, %v1792
        %v1794 = vpop.f32.mrf.mxu0
        %1795 = vdwg.mxu0
        %v1796 = vadd.f32 %v1542, %v1734
        %v1797 = vadd.f32 %v1543, %v1737
        %v1798 = vadd.f32 %v1544, %v1742
        %v1799 = vadd.f32 %v1545, %v1745
        %v1800 = vadd.f32 %v1546, %v1750
        %v1801 = vadd.f32 %v1547, %v1753
        %v1802 = vadd.f32 %v1548, %v1758
        %v1803 = vadd.f32 %v1549, %v1761
        %v1804 = vadd.f32 %v1550, %v1766
        %v1805 = vadd.f32 %v1551, %v1769
        %v1806 = vadd.f32 %v1552, %v1774
        %v1807 = vadd.f32 %v1553, %v1777
        %v1808 = vadd.f32 %v1554, %v1782
        %v1809 = vadd.f32 %v1555, %v1785
        %v1810 = vadd.f32 %v1556, %v1790
        %v1811 = vadd.f32 %v1557, %v1793
        %s1812 = sadd.s32 %s185, 2
        %s1813 = smul.u32 %s1812, 3
        %s1814 = smul.addr %s1813, 4
        %s1815 = scalar_lea.vmem %s182, %s1814
        %v1816 = vld [vmem:[%s1815] sm:$0xf]
        %v1817 = vld [vmem:[%s1815 + $0x4] sm:$0xf]
        %v1818 = vld [vmem:[%s1815 + $0xc] sm:$0xf]
        %v1819 = vld [vmem:[%s1815 + $0x10] sm:$0xf]
        %v1820 = vld [vmem:[%s1815 + $0x18] sm:$0xf]
        %v1821 = vld [vmem:[%s1815 + $0x1c] sm:$0xf]
        %v1822 = vld [vmem:[%s1815 + $0x24] sm:$0xf]
        %v1823 = vld [vmem:[%s1815 + $0x28] sm:$0xf]
        %v1824 = vld [vmem:[%s1815 + $0x30] sm:$0xf]
        %v1825 = vld [vmem:[%s1815 + $0x34] sm:$0xf]
        %v1826 = vld [vmem:[%s1815 + $0x3c] sm:$0xf]
        %v1827 = vld [vmem:[%s1815 + $0x40] sm:$0xf]
        %v1828 = vld [vmem:[%s1815 + $0x48] sm:$0xf]
        %v1829 = vld [vmem:[%s1815 + $0x4c] sm:$0xf]
        %v1830 = vld [vmem:[%s1815 + $0x54] sm:$0xf]
        %v1831 = vld [vmem:[%s1815 + $0x58] sm:$0xf]
        %s1832 = scalar_lea.vmem %s1, 24
        %v1833 = vld [vmem:[%s1832] sm:$0xf]
        %v1850 = vunpack.c.l.b16 %v1816
        %v1851 = vunpack.c.l.b16 %v1817
        %v1852 = vunpack.c.l.b16 %v1818
        %v1853 = vunpack.c.l.b16 %v1819
        %v1854 = vunpack.c.l.b16 %v1820
        %v1855 = vunpack.c.l.b16 %v1821
        %v1856 = vunpack.c.l.b16 %v1822
        %v1857 = vunpack.c.l.b16 %v1823
        %v1858 = vunpack.c.l.b16 %v1824
        %v1859 = vunpack.c.l.b16 %v1825
        %v1860 = vunpack.c.l.b16 %v1826
        %v1861 = vunpack.c.l.b16 %v1827
        %v1862 = vunpack.c.l.b16 %v1828
        %v1863 = vunpack.c.l.b16 %v1829
        %v1864 = vunpack.c.l.b16 %v1830
        %v1865 = vunpack.c.l.b16 %v1831
        %v1866 = vpack.c.b16 %v1851, %v1850
        %v1867 = vpack.c.b16 %v1853, %v1852
        %v1868 = vpack.c.b16 %v1855, %v1854
        %v1869 = vpack.c.b16 %v1857, %v1856
        %v1870 = vpack.c.b16 %v1859, %v1858
        %v1871 = vpack.c.b16 %v1861, %v1860
        %v1872 = vpack.c.b16 %v1863, %v1862
        %v1873 = vpack.c.b16 %v1865, %v1864
        %v1875 = vsel %vm435, %v1866, 0
        %v1878 = vsel %vm435, %v1867, 0
        %v1881 = vsel %vm435, %v1868, 0
        %v1884 = vsel %vm435, %v1869, 0
        %v1887 = vsel %vm435, %v1870, 0
        %v1890 = vsel %vm435, %v1871, 0
        %v1893 = vsel %vm435, %v1872, 0
        %v1896 = vsel %vm435, %v1873, 0
        %v1899 = vsel %vm460, %v1833, 0
        %1901 = vmatprep.subr.bf16.mxu0 0
        %1902 = vmatpush1.bf16.msra.mxu0 0
        %1903 = vmatprep.subr.bf16.mxu0 0
        %1904 = vmatpush1.bf16.msra.mxu0 0
        %1905 = vmatprep.subr.bf16.mxu0 0
        %1906 = vmatpush1.bf16.msra.mxu0 0
        %1907 = vmatprep.subr.bf16.mxu0 0
        %1908 = vmatpush1.bf16.msra.mxu0 0
        %1909 = vmatprep.subr.bf16.mxu0 0
        %1910 = vmatpush1.bf16.msra.mxu0 0
        %1911 = vmatprep.subr.bf16.mxu0 0
        %1912 = vmatpush1.bf16.msra.mxu0 0
        %1913 = vmatprep.subr.bf16.mxu0 0
        %1914 = vmatpush1.bf16.msra.mxu0 0
        %1915 = vmatprep.subr.bf16.mxu0 0
        %1916 = vmatpush1.bf16.msra.mxu0 %v1899
        %1917 = vmatprep.subr.bf16.mxu0 0
        %1918 = vmatpush2.bf16.msra.mxu0 0
        %1919 = vmatprep.subr.bf16.mxu0 0
        %1920 = vmatpush2.bf16.msra.mxu0 0
        %1921 = vmatprep.subr.bf16.mxu0 0
        %1922 = vmatpush2.bf16.msra.mxu0 0
        %1923 = vmatprep.subr.bf16.mxu0 0
        %1924 = vmatpush2.bf16.msra.mxu0 0
        %1925 = vmatprep.subr.bf16.mxu0 0
        %1926 = vmatpush2.bf16.msra.mxu0 0
        %1927 = vmatprep.subr.bf16.mxu0 0
        %1928 = vmatpush2.bf16.msra.mxu0 0
        %1929 = vmatprep.subr.bf16.mxu0 0
        %1930 = vmatpush2.bf16.msra.mxu0 0
        %1931 = vmatprep.subr.bf16.mxu0 0
        %1932 = vmatpush2.bf16.msra.mxu0 0
        %1933 = vmatprep.mubr.bf16.mxu0 0
        %1934 = vmatmul.mubr.bf16.gmra.mxu0 %v1875
        %v1935 = vpop.f32.mrf.mxu0
        %v1936 = vadd.f32 0.0, %v1935
        %v1937 = vpop.f32.mrf.mxu0
        %v1938 = vpop.f32.mrf.mxu0
        %v1939 = vadd.f32 0.0, %v1938
        %v1940 = vpop.f32.mrf.mxu0
        %1941 = vmatprep.mubr.bf16.mxu0 0
        %1942 = vmatmul.mubr.bf16.gmra.mxu0 %v1878
        %v1943 = vpop.f32.mrf.mxu0
        %v1944 = vadd.f32 0.0, %v1943
        %v1945 = vpop.f32.mrf.mxu0
        %v1946 = vpop.f32.mrf.mxu0
        %v1947 = vadd.f32 0.0, %v1946
        %v1948 = vpop.f32.mrf.mxu0
        %1949 = vmatprep.mubr.bf16.mxu0 0
        %1950 = vmatmul.mubr.bf16.gmra.mxu0 %v1881
        %v1951 = vpop.f32.mrf.mxu0
        %v1952 = vadd.f32 0.0, %v1951
        %v1953 = vpop.f32.mrf.mxu0
        %v1954 = vpop.f32.mrf.mxu0
        %v1955 = vadd.f32 0.0, %v1954
        %v1956 = vpop.f32.mrf.mxu0
        %1957 = vmatprep.mubr.bf16.mxu0 0
        %1958 = vmatmul.mubr.bf16.gmra.mxu0 %v1884
        %v1959 = vpop.f32.mrf.mxu0
        %v1960 = vadd.f32 0.0, %v1959
        %v1961 = vpop.f32.mrf.mxu0
        %v1962 = vpop.f32.mrf.mxu0
        %v1963 = vadd.f32 0.0, %v1962
        %v1964 = vpop.f32.mrf.mxu0
        %1965 = vmatprep.mubr.bf16.mxu0 0
        %1966 = vmatmul.mubr.bf16.gmra.mxu0 %v1887
        %v1967 = vpop.f32.mrf.mxu0
        %v1968 = vadd.f32 0.0, %v1967
        %v1969 = vpop.f32.mrf.mxu0
        %v1970 = vpop.f32.mrf.mxu0
        %v1971 = vadd.f32 0.0, %v1970
        %v1972 = vpop.f32.mrf.mxu0
        %1973 = vmatprep.mubr.bf16.mxu0 0
        %1974 = vmatmul.mubr.bf16.gmra.mxu0 %v1890
        %v1975 = vpop.f32.mrf.mxu0
        %v1976 = vadd.f32 0.0, %v1975
        %v1977 = vpop.f32.mrf.mxu0
        %v1978 = vpop.f32.mrf.mxu0
        %v1979 = vadd.f32 0.0, %v1978
        %v1980 = vpop.f32.mrf.mxu0
        %1981 = vmatprep.mubr.bf16.mxu0 0
        %1982 = vmatmul.mubr.bf16.gmra.mxu0 %v1893
        %v1983 = vpop.f32.mrf.mxu0
        %v1984 = vadd.f32 0.0, %v1983
        %v1985 = vpop.f32.mrf.mxu0
        %v1986 = vpop.f32.mrf.mxu0
        %v1987 = vadd.f32 0.0, %v1986
        %v1988 = vpop.f32.mrf.mxu0
        %1989 = vmatprep.mubr.bf16.mxu0 0
        %1990 = vmatmul.mubr.bf16.gmra.mxu0 %v1896
        %v1991 = vpop.f32.mrf.mxu0
        %v1992 = vadd.f32 0.0, %v1991
        %v1993 = vpop.f32.mrf.mxu0
        %v1994 = vpop.f32.mrf.mxu0
        %v1995 = vadd.f32 0.0, %v1994
        %v1996 = vpop.f32.mrf.mxu0
        %1997 = vdwg.mxu0
        %v1998 = vadd.f32 %v1796, %v1936
        %v1999 = vadd.f32 %v1797, %v1939
        %v2000 = vadd.f32 %v1798, %v1944
        %v2001 = vadd.f32 %v1799, %v1947
        %v2002 = vadd.f32 %v1800, %v1952
        %v2003 = vadd.f32 %v1801, %v1955
        %v2004 = vadd.f32 %v1802, %v1960
        %v2005 = vadd.f32 %v1803, %v1963
        %v2006 = vadd.f32 %v1804, %v1968
        %v2007 = vadd.f32 %v1805, %v1971
        %v2008 = vadd.f32 %v1806, %v1976
        %v2009 = vadd.f32 %v1807, %v1979
        %v2010 = vadd.f32 %v1808, %v1984
        %v2011 = vadd.f32 %v1809, %v1987
        %v2012 = vadd.f32 %v1810, %v1992
        %v2013 = vadd.f32 %v1811, %v1995
        %v2014 = vld [vmem:[%s1815] sm:$0xf]
        %v2015 = vld [vmem:[%s1815 + $0x4] sm:$0xf]
        %v2016 = vld [vmem:[%s1815 + $0x8] sm:$0x1]
        %v2017 = vld [vmem:[%s1815 + $0xc] sm:$0xf]
        %v2018 = vld [vmem:[%s1815 + $0x10] sm:$0xf]
        %v2019 = vld [vmem:[%s1815 + $0x14] sm:$0x1]
        %v2020 = vld [vmem:[%s1815 + $0x18] sm:$0xf]
        %v2021 = vld [vmem:[%s1815 + $0x1c] sm:$0xf]
        %v2022 = vld [vmem:[%s1815 + $0x20] sm:$0x1]
        %v2023 = vld [vmem:[%s1815 + $0x24] sm:$0xf]
        %v2024 = vld [vmem:[%s1815 + $0x28] sm:$0xf]
        %v2025 = vld [vmem:[%s1815 + $0x2c] sm:$0x1]
        %v2026 = vld [vmem:[%s1815 + $0x30] sm:$0xf]
        %v2027 = vld [vmem:[%s1815 + $0x34] sm:$0xf]
        %v2028 = vld [vmem:[%s1815 + $0x38] sm:$0x1]
        %v2029 = vld [vmem:[%s1815 + $0x3c] sm:$0xf]
        %v2030 = vld [vmem:[%s1815 + $0x40] sm:$0xf]
        %v2031 = vld [vmem:[%s1815 + $0x44] sm:$0x1]
        %v2032 = vld [vmem:[%s1815 + $0x48] sm:$0xf]
        %v2033 = vld [vmem:[%s1815 + $0x4c] sm:$0xf]
        %v2034 = vld [vmem:[%s1815 + $0x50] sm:$0x1]
        %v2035 = vld [vmem:[%s1815 + $0x54] sm:$0xf]
        %v2036 = vld [vmem:[%s1815 + $0x58] sm:$0xf]
        %v2037 = vld [vmem:[%s1815 + $0x5c] sm:$0x1]
        %v2039 = vshrl.u32 %v2014, 16
        %v2041 = vrot.slane %v2039, 4
        %v2042 = vshll.u32 %v2014, 16
        %v2044 = vrot.slane %v2042, 5
        %v2045 = vor.u32 %v2041, %v2044
        %v2046 = vrot.slane %v2045, 4
        %v2048 = vshll.u32 %v2015, 16
        %v2050 = vrot.slane %v2048, 5
        %v2051 = vsel %vm216, %v2046, %v2050
        %v2052 = vshrl.u32 %v2015, 16
        %v2054 = vrot.slane %v2052, 4
        %v2055 = vor.u32 %v2054, %v2050
        %v2056 = vrot.slane %v2055, 4
        %v2058 = vshll.u32 %v2016, 16
        %v2060 = vrot.slane %v2058, 5
        %v2061 = vsel %vm216, %v2056, %v2060
        %v2063 = vshrl.u32 %v2017, 16
        %v2065 = vrot.slane %v2063, 4
        %v2066 = vshll.u32 %v2017, 16
        %v2068 = vrot.slane %v2066, 5
        %v2069 = vor.u32 %v2065, %v2068
        %v2070 = vrot.slane %v2069, 4
        %v2072 = vshll.u32 %v2018, 16
        %v2074 = vrot.slane %v2072, 5
        %v2075 = vsel %vm216, %v2070, %v2074
        %v2076 = vshrl.u32 %v2018, 16
        %v2078 = vrot.slane %v2076, 4
        %v2079 = vor.u32 %v2078, %v2074
        %v2080 = vrot.slane %v2079, 4
        %v2082 = vshll.u32 %v2019, 16
        %v2084 = vrot.slane %v2082, 5
        %v2085 = vsel %vm216, %v2080, %v2084
        %v2087 = vshrl.u32 %v2020, 16
        %v2089 = vrot.slane %v2087, 4
        %v2090 = vshll.u32 %v2020, 16
        %v2092 = vrot.slane %v2090, 5
        %v2093 = vor.u32 %v2089, %v2092
        %v2094 = vrot.slane %v2093, 4
        %v2096 = vshll.u32 %v2021, 16
        %v2098 = vrot.slane %v2096, 5
        %v2099 = vsel %vm216, %v2094, %v2098
        %v2100 = vshrl.u32 %v2021, 16
        %v2102 = vrot.slane %v2100, 4
        %v2103 = vor.u32 %v2102, %v2098
        %v2104 = vrot.slane %v2103, 4
        %v2106 = vshll.u32 %v2022, 16
        %v2108 = vrot.slane %v2106, 5
        %v2109 = vsel %vm216, %v2104, %v2108
        %v2111 = vshrl.u32 %v2023, 16
        %v2113 = vrot.slane %v2111, 4
        %v2114 = vshll.u32 %v2023, 16
        %v2116 = vrot.slane %v2114, 5
        %v2117 = vor.u32 %v2113, %v2116
        %v2118 = vrot.slane %v2117, 4
        %v2120 = vshll.u32 %v2024, 16
        %v2122 = vrot.slane %v2120, 5
        %v2123 = vsel %vm216, %v2118, %v2122
        %v2124 = vshrl.u32 %v2024, 16
        %v2126 = vrot.slane %v2124, 4
        %v2127 = vor.u32 %v2126, %v2122
        %v2128 = vrot.slane %v2127, 4
        %v2130 = vshll.u32 %v2025, 16
        %v2132 = vrot.slane %v2130, 5
        %v2133 = vsel %vm216, %v2128, %v2132
        %v2135 = vshrl.u32 %v2026, 16
        %v2137 = vrot.slane %v2135, 4
        %v2138 = vshll.u32 %v2026, 16
        %v2140 = vrot.slane %v2138, 5
        %v2141 = vor.u32 %v2137, %v2140
        %v2142 = vrot.slane %v2141, 4
        %v2144 = vshll.u32 %v2027, 16
        %v2146 = vrot.slane %v2144, 5
        %v2147 = vsel %vm216, %v2142, %v2146
        %v2148 = vshrl.u32 %v2027, 16
        %v2150 = vrot.slane %v2148, 4
        %v2151 = vor.u32 %v2150, %v2146
        %v2152 = vrot.slane %v2151, 4
        %v2154 = vshll.u32 %v2028, 16
        %v2156 = vrot.slane %v2154, 5
        %v2157 = vsel %vm216, %v2152, %v2156
        %v2159 = vshrl.u32 %v2029, 16
        %v2161 = vrot.slane %v2159, 4
        %v2162 = vshll.u32 %v2029, 16
        %v2164 = vrot.slane %v2162, 5
        %v2165 = vor.u32 %v2161, %v2164
        %v2166 = vrot.slane %v2165, 4
        %v2168 = vshll.u32 %v2030, 16
        %v2170 = vrot.slane %v2168, 5
        %v2171 = vsel %vm216, %v2166, %v2170
        %v2172 = vshrl.u32 %v2030, 16
        %v2174 = vrot.slane %v2172, 4
        %v2175 = vor.u32 %v2174, %v2170
        %v2176 = vrot.slane %v2175, 4
        %v2178 = vshll.u32 %v2031, 16
        %v2180 = vrot.slane %v2178, 5
        %v2181 = vsel %vm216, %v2176, %v2180
        %v2183 = vshrl.u32 %v2032, 16
        %v2185 = vrot.slane %v2183, 4
        %v2186 = vshll.u32 %v2032, 16
        %v2188 = vrot.slane %v2186, 5
        %v2189 = vor.u32 %v2185, %v2188
        %v2190 = vrot.slane %v2189, 4
        %v2192 = vshll.u32 %v2033, 16
        %v2194 = vrot.slane %v2192, 5
        %v2195 = vsel %vm216, %v2190, %v2194
        %v2196 = vshrl.u32 %v2033, 16
        %v2198 = vrot.slane %v2196, 4
        %v2199 = vor.u32 %v2198, %v2194
        %v2200 = vrot.slane %v2199, 4
        %v2202 = vshll.u32 %v2034, 16
        %v2204 = vrot.slane %v2202, 5
        %v2205 = vsel %vm216, %v2200, %v2204
        %v2207 = vshrl.u32 %v2035, 16
        %v2209 = vrot.slane %v2207, 4
        %v2210 = vshll.u32 %v2035, 16
        %v2212 = vrot.slane %v2210, 5
        %v2213 = vor.u32 %v2209, %v2212
        %v2214 = vrot.slane %v2213, 4
        %v2216 = vshll.u32 %v2036, 16
        %v2218 = vrot.slane %v2216, 5
        %v2219 = vsel %vm216, %v2214, %v2218
        %v2220 = vshrl.u32 %v2036, 16
        %v2222 = vrot.slane %v2220, 4
        %v2223 = vor.u32 %v2222, %v2218
        %v2224 = vrot.slane %v2223, 4
        %v2226 = vshll.u32 %v2037, 16
        %v2228 = vrot.slane %v2226, 5
        %v2229 = vsel %vm216, %v2224, %v2228
        %s2230 = scalar_lea.vmem %s1, 28
        %v2231 = vld [vmem:[%s2230] sm:$0xf]
        %v2232 = vunpack.c.l.b16 %v2051
        %v2233 = vunpack.c.l.b16 %v2061
        %v2234 = vunpack.c.l.b16 %v2075
        %v2235 = vunpack.c.l.b16 %v2085
        %v2236 = vunpack.c.l.b16 %v2099
        %v2237 = vunpack.c.l.b16 %v2109
        %v2238 = vunpack.c.l.b16 %v2123
        %v2239 = vunpack.c.l.b16 %v2133
        %v2240 = vunpack.c.l.b16 %v2147
        %v2241 = vunpack.c.l.b16 %v2157
        %v2242 = vunpack.c.l.b16 %v2171
        %v2243 = vunpack.c.l.b16 %v2181
        %v2244 = vunpack.c.l.b16 %v2195
        %v2245 = vunpack.c.l.b16 %v2205
        %v2246 = vunpack.c.l.b16 %v2219
        %v2247 = vunpack.c.l.b16 %v2229
        %v2248 = vpack.c.b16 %v2233, %v2232
        %v2249 = vpack.c.b16 %v2235, %v2234
        %v2250 = vpack.c.b16 %v2237, %v2236
        %v2251 = vpack.c.b16 %v2239, %v2238
        %v2252 = vpack.c.b16 %v2241, %v2240
        %v2253 = vpack.c.b16 %v2243, %v2242
        %v2254 = vpack.c.b16 %v2245, %v2244
        %v2255 = vpack.c.b16 %v2247, %v2246
        %v2257 = vsel %vm435, %v2248, 0
        %v2260 = vsel %vm435, %v2249, 0
        %v2263 = vsel %vm435, %v2250, 0
        %v2266 = vsel %vm435, %v2251, 0
        %v2269 = vsel %vm435, %v2252, 0
        %v2272 = vsel %vm435, %v2253, 0
        %v2275 = vsel %vm435, %v2254, 0
        %v2278 = vsel %vm435, %v2255, 0
        %v2281 = vsel %vm460, %v2231, 0
        %2283 = vmatprep.subr.bf16.mxu0 0
        %2284 = vmatpush1.bf16.msra.mxu0 0
        %2285 = vmatprep.subr.bf16.mxu0 0
        %2286 = vmatpush1.bf16.msra.mxu0 0
        %2287 = vmatprep.subr.bf16.mxu0 0
        %2288 = vmatpush1.bf16.msra.mxu0 0
        %2289 = vmatprep.subr.bf16.mxu0 0
        %2290 = vmatpush1.bf16.msra.mxu0 0
        %2291 = vmatprep.subr.bf16.mxu0 0
        %2292 = vmatpush1.bf16.msra.mxu0 0
        %2293 = vmatprep.subr.bf16.mxu0 0
        %2294 = vmatpush1.bf16.msra.mxu0 0
        %2295 = vmatprep.subr.bf16.mxu0 0
        %2296 = vmatpush1.bf16.msra.mxu0 0
        %2297 = vmatprep.subr.bf16.mxu0 0
        %2298 = vmatpush1.bf16.msra.mxu0 %v2281
        %2299 = vmatprep.subr.bf16.mxu0 0
        %2300 = vmatpush2.bf16.msra.mxu0 0
        %2301 = vmatprep.subr.bf16.mxu0 0
        %2302 = vmatpush2.bf16.msra.mxu0 0
        %2303 = vmatprep.subr.bf16.mxu0 0
        %2304 = vmatpush2.bf16.msra.mxu0 0
        %2305 = vmatprep.subr.bf16.mxu0 0
        %2306 = vmatpush2.bf16.msra.mxu0 0
        %2307 = vmatprep.subr.bf16.mxu0 0
        %2308 = vmatpush2.bf16.msra.mxu0 0
        %2309 = vmatprep.subr.bf16.mxu0 0
        %2310 = vmatpush2.bf16.msra.mxu0 0
        %2311 = vmatprep.subr.bf16.mxu0 0
        %2312 = vmatpush2.bf16.msra.mxu0 0
        %2313 = vmatprep.subr.bf16.mxu0 0
        %2314 = vmatpush2.bf16.msra.mxu0 0
        %2315 = vmatprep.mubr.bf16.mxu0 0
        %2316 = vmatmul.mubr.bf16.gmra.mxu0 %v2257
        %v2317 = vpop.f32.mrf.mxu0
        %v2318 = vadd.f32 0.0, %v2317
        %v2319 = vpop.f32.mrf.mxu0
        %v2320 = vpop.f32.mrf.mxu0
        %v2321 = vadd.f32 0.0, %v2320
        %v2322 = vpop.f32.mrf.mxu0
        %2323 = vmatprep.mubr.bf16.mxu0 0
        %2324 = vmatmul.mubr.bf16.gmra.mxu0 %v2260
        %v2325 = vpop.f32.mrf.mxu0
        %v2326 = vadd.f32 0.0, %v2325
        %v2327 = vpop.f32.mrf.mxu0
        %v2328 = vpop.f32.mrf.mxu0
        %v2329 = vadd.f32 0.0, %v2328
        %v2330 = vpop.f32.mrf.mxu0
        %2331 = vmatprep.mubr.bf16.mxu0 0
        %2332 = vmatmul.mubr.bf16.gmra.mxu0 %v2263
        %v2333 = vpop.f32.mrf.mxu0
        %v2334 = vadd.f32 0.0, %v2333
        %v2335 = vpop.f32.mrf.mxu0
        %v2336 = vpop.f32.mrf.mxu0
        %v2337 = vadd.f32 0.0, %v2336
        %v2338 = vpop.f32.mrf.mxu0
        %2339 = vmatprep.mubr.bf16.mxu0 0
        %2340 = vmatmul.mubr.bf16.gmra.mxu0 %v2266
        %v2341 = vpop.f32.mrf.mxu0
        %v2342 = vadd.f32 0.0, %v2341
        %v2343 = vpop.f32.mrf.mxu0
        %v2344 = vpop.f32.mrf.mxu0
        %v2345 = vadd.f32 0.0, %v2344
        %v2346 = vpop.f32.mrf.mxu0
        %2347 = vmatprep.mubr.bf16.mxu0 0
        %2348 = vmatmul.mubr.bf16.gmra.mxu0 %v2269
        %v2349 = vpop.f32.mrf.mxu0
        %v2350 = vadd.f32 0.0, %v2349
        %v2351 = vpop.f32.mrf.mxu0
        %v2352 = vpop.f32.mrf.mxu0
        %v2353 = vadd.f32 0.0, %v2352
        %v2354 = vpop.f32.mrf.mxu0
        %2355 = vmatprep.mubr.bf16.mxu0 0
        %2356 = vmatmul.mubr.bf16.gmra.mxu0 %v2272
        %v2357 = vpop.f32.mrf.mxu0
        %v2358 = vadd.f32 0.0, %v2357
        %v2359 = vpop.f32.mrf.mxu0
        %v2360 = vpop.f32.mrf.mxu0
        %v2361 = vadd.f32 0.0, %v2360
        %v2362 = vpop.f32.mrf.mxu0
        %2363 = vmatprep.mubr.bf16.mxu0 0
        %2364 = vmatmul.mubr.bf16.gmra.mxu0 %v2275
        %v2365 = vpop.f32.mrf.mxu0
        %v2366 = vadd.f32 0.0, %v2365
        %v2367 = vpop.f32.mrf.mxu0
        %v2368 = vpop.f32.mrf.mxu0
        %v2369 = vadd.f32 0.0, %v2368
        %v2370 = vpop.f32.mrf.mxu0
        %2371 = vmatprep.mubr.bf16.mxu0 0
        %2372 = vmatmul.mubr.bf16.gmra.mxu0 %v2278
        %v2373 = vpop.f32.mrf.mxu0
        %v2374 = vadd.f32 0.0, %v2373
        %v2375 = vpop.f32.mrf.mxu0
        %v2376 = vpop.f32.mrf.mxu0
        %v2377 = vadd.f32 0.0, %v2376
        %v2378 = vpop.f32.mrf.mxu0
        %2379 = vdwg.mxu0
        %v2380 = vadd.f32 %v1998, %v2318
        %v2381 = vadd.f32 %v1999, %v2321
        %v2382 = vadd.f32 %v2000, %v2326
        %v2383 = vadd.f32 %v2001, %v2329
        %v2384 = vadd.f32 %v2002, %v2334
        %v2385 = vadd.f32 %v2003, %v2337
        %v2386 = vadd.f32 %v2004, %v2342
        %v2387 = vadd.f32 %v2005, %v2345
        %v2388 = vadd.f32 %v2006, %v2350
        %v2389 = vadd.f32 %v2007, %v2353
        %v2390 = vadd.f32 %v2008, %v2358
        %v2391 = vadd.f32 %v2009, %v2361
        %v2392 = vadd.f32 %v2010, %v2366
        %v2393 = vadd.f32 %v2011, %v2369
        %v2394 = vadd.f32 %v2012, %v2374
        %v2395 = vadd.f32 %v2013, %v2377
        %v2396 = vld [vmem:[%s1815] sm:$0xe]
        %v2397 = vld [vmem:[%s1815 + $0xc] sm:$0xe]
        %v2398 = vld [vmem:[%s1815 + $0x18] sm:$0xe]
        %v2399 = vld [vmem:[%s1815 + $0x24] sm:$0xe]
        %v2400 = vld [vmem:[%s1815 + $0x30] sm:$0xe]
        %v2401 = vld [vmem:[%s1815 + $0x3c] sm:$0xe]
        %v2402 = vld [vmem:[%s1815 + $0x48] sm:$0xe]
        %v2403 = vld [vmem:[%s1815 + $0x54] sm:$0xe]
        %v2428 = vrot.slane %v2396, 5
        %v2429 = vrot.slane %v2428, 4
        %v2430 = vrot.slane %v2015, 5
        %v2431 = vsel %vm751, %v2429, %v2430
        %v2432 = vrot.slane %v2430, 4
        %v2433 = vrot.slane %v2016, 5
        %v2434 = vsel %vm751, %v2432, %v2433
        %v2435 = vrot.slane %v2397, 5
        %v2436 = vrot.slane %v2435, 4
        %v2437 = vrot.slane %v2018, 5
        %v2438 = vsel %vm751, %v2436, %v2437
        %v2439 = vrot.slane %v2437, 4
        %v2440 = vrot.slane %v2019, 5
        %v2441 = vsel %vm751, %v2439, %v2440
        %v2442 = vrot.slane %v2398, 5
        %v2443 = vrot.slane %v2442, 4
        %v2444 = vrot.slane %v2021, 5
        %v2445 = vsel %vm751, %v2443, %v2444
        %v2446 = vrot.slane %v2444, 4
        %v2447 = vrot.slane %v2022, 5
        %v2448 = vsel %vm751, %v2446, %v2447
        %v2449 = vrot.slane %v2399, 5
        %v2450 = vrot.slane %v2449, 4
        %v2451 = vrot.slane %v2024, 5
        %v2452 = vsel %vm751, %v2450, %v2451
        %v2453 = vrot.slane %v2451, 4
        %v2454 = vrot.slane %v2025, 5
        %v2455 = vsel %vm751, %v2453, %v2454
        %v2456 = vrot.slane %v2400, 5
        %v2457 = vrot.slane %v2456, 4
        %v2458 = vrot.slane %v2027, 5
        %v2459 = vsel %vm751, %v2457, %v2458
        %v2460 = vrot.slane %v2458, 4
        %v2461 = vrot.slane %v2028, 5
        %v2462 = vsel %vm751, %v2460, %v2461
        %v2463 = vrot.slane %v2401, 5
        %v2464 = vrot.slane %v2463, 4
        %v2465 = vrot.slane %v2030, 5
        %v2466 = vsel %vm751, %v2464, %v2465
        %v2467 = vrot.slane %v2465, 4
        %v2468 = vrot.slane %v2031, 5
        %v2469 = vsel %vm751, %v2467, %v2468
        %v2470 = vrot.slane %v2402, 5
        %v2471 = vrot.slane %v2470, 4
        %v2472 = vrot.slane %v2033, 5
        %v2473 = vsel %vm751, %v2471, %v2472
        %v2474 = vrot.slane %v2472, 4
        %v2475 = vrot.slane %v2034, 5
        %v2476 = vsel %vm751, %v2474, %v2475
        %v2477 = vrot.slane %v2403, 5
        %v2478 = vrot.slane %v2477, 4
        %v2479 = vrot.slane %v2036, 5
        %v2480 = vsel %vm751, %v2478, %v2479
        %v2481 = vrot.slane %v2479, 4
        %v2482 = vrot.slane %v2037, 5
        %v2483 = vsel %vm751, %v2481, %v2482
        %s2484 = scalar_lea.vmem %s1, 32
        %v2485 = vld [vmem:[%s2484] sm:$0xf]
        %v2486 = vunpack.c.l.b16 %v2431
        %v2487 = vunpack.c.l.b16 %v2434
        %v2488 = vunpack.c.l.b16 %v2438
        %v2489 = vunpack.c.l.b16 %v2441
        %v2490 = vunpack.c.l.b16 %v2445
        %v2491 = vunpack.c.l.b16 %v2448
        %v2492 = vunpack.c.l.b16 %v2452
        %v2493 = vunpack.c.l.b16 %v2455
        %v2494 = vunpack.c.l.b16 %v2459
        %v2495 = vunpack.c.l.b16 %v2462
        %v2496 = vunpack.c.l.b16 %v2466
        %v2497 = vunpack.c.l.b16 %v2469
        %v2498 = vunpack.c.l.b16 %v2473
        %v2499 = vunpack.c.l.b16 %v2476
        %v2500 = vunpack.c.l.b16 %v2480
        %v2501 = vunpack.c.l.b16 %v2483
        %v2502 = vpack.c.b16 %v2487, %v2486
        %v2503 = vpack.c.b16 %v2489, %v2488
        %v2504 = vpack.c.b16 %v2491, %v2490
        %v2505 = vpack.c.b16 %v2493, %v2492
        %v2506 = vpack.c.b16 %v2495, %v2494
        %v2507 = vpack.c.b16 %v2497, %v2496
        %v2508 = vpack.c.b16 %v2499, %v2498
        %v2509 = vpack.c.b16 %v2501, %v2500
        %v2511 = vsel %vm435, %v2502, 0
        %v2514 = vsel %vm435, %v2503, 0
        %v2517 = vsel %vm435, %v2504, 0
        %v2520 = vsel %vm435, %v2505, 0
        %v2523 = vsel %vm435, %v2506, 0
        %v2526 = vsel %vm435, %v2507, 0
        %v2529 = vsel %vm435, %v2508, 0
        %v2532 = vsel %vm435, %v2509, 0
        %v2535 = vsel %vm460, %v2485, 0
        %2537 = vmatprep.subr.bf16.mxu0 0
        %2538 = vmatpush1.bf16.msra.mxu0 0
        %2539 = vmatprep.subr.bf16.mxu0 0
        %2540 = vmatpush1.bf16.msra.mxu0 0
        %2541 = vmatprep.subr.bf16.mxu0 0
        %2542 = vmatpush1.bf16.msra.mxu0 0
        %2543 = vmatprep.subr.bf16.mxu0 0
        %2544 = vmatpush1.bf16.msra.mxu0 0
        %2545 = vmatprep.subr.bf16.mxu0 0
        %2546 = vmatpush1.bf16.msra.mxu0 0
        %2547 = vmatprep.subr.bf16.mxu0 0
        %2548 = vmatpush1.bf16.msra.mxu0 0
        %2549 = vmatprep.subr.bf16.mxu0 0
        %2550 = vmatpush1.bf16.msra.mxu0 0
        %2551 = vmatprep.subr.bf16.mxu0 0
        %2552 = vmatpush1.bf16.msra.mxu0 %v2535
        %2553 = vmatprep.subr.bf16.mxu0 0
        %2554 = vmatpush2.bf16.msra.mxu0 0
        %2555 = vmatprep.subr.bf16.mxu0 0
        %2556 = vmatpush2.bf16.msra.mxu0 0
        %2557 = vmatprep.subr.bf16.mxu0 0
        %2558 = vmatpush2.bf16.msra.mxu0 0
        %2559 = vmatprep.subr.bf16.mxu0 0
        %2560 = vmatpush2.bf16.msra.mxu0 0
        %2561 = vmatprep.subr.bf16.mxu0 0
        %2562 = vmatpush2.bf16.msra.mxu0 0
        %2563 = vmatprep.subr.bf16.mxu0 0
        %2564 = vmatpush2.bf16.msra.mxu0 0
        %2565 = vmatprep.subr.bf16.mxu0 0
        %2566 = vmatpush2.bf16.msra.mxu0 0
        %2567 = vmatprep.subr.bf16.mxu0 0
        %2568 = vmatpush2.bf16.msra.mxu0 0
        %2569 = vmatprep.mubr.bf16.mxu0 0
        %2570 = vmatmul.mubr.bf16.gmra.mxu0 %v2511
        %v2571 = vpop.f32.mrf.mxu0
        %v2572 = vadd.f32 0.0, %v2571
        %v2573 = vpop.f32.mrf.mxu0
        %v2574 = vpop.f32.mrf.mxu0
        %v2575 = vadd.f32 0.0, %v2574
        %v2576 = vpop.f32.mrf.mxu0
        %2577 = vmatprep.mubr.bf16.mxu0 0
        %2578 = vmatmul.mubr.bf16.gmra.mxu0 %v2514
        %v2579 = vpop.f32.mrf.mxu0
        %v2580 = vadd.f32 0.0, %v2579
        %v2581 = vpop.f32.mrf.mxu0
        %v2582 = vpop.f32.mrf.mxu0
        %v2583 = vadd.f32 0.0, %v2582
        %v2584 = vpop.f32.mrf.mxu0
        %2585 = vmatprep.mubr.bf16.mxu0 0
        %2586 = vmatmul.mubr.bf16.gmra.mxu0 %v2517
        %v2587 = vpop.f32.mrf.mxu0
        %v2588 = vadd.f32 0.0, %v2587
        %v2589 = vpop.f32.mrf.mxu0
        %v2590 = vpop.f32.mrf.mxu0
        %v2591 = vadd.f32 0.0, %v2590
        %v2592 = vpop.f32.mrf.mxu0
        %2593 = vmatprep.mubr.bf16.mxu0 0
        %2594 = vmatmul.mubr.bf16.gmra.mxu0 %v2520
        %v2595 = vpop.f32.mrf.mxu0
        %v2596 = vadd.f32 0.0, %v2595
        %v2597 = vpop.f32.mrf.mxu0
        %v2598 = vpop.f32.mrf.mxu0
        %v2599 = vadd.f32 0.0, %v2598
        %v2600 = vpop.f32.mrf.mxu0
        %2601 = vmatprep.mubr.bf16.mxu0 0
        %2602 = vmatmul.mubr.bf16.gmra.mxu0 %v2523
        %v2603 = vpop.f32.mrf.mxu0
        %v2604 = vadd.f32 0.0, %v2603
        %v2605 = vpop.f32.mrf.mxu0
        %v2606 = vpop.f32.mrf.mxu0
        %v2607 = vadd.f32 0.0, %v2606
        %v2608 = vpop.f32.mrf.mxu0
        %2609 = vmatprep.mubr.bf16.mxu0 0
        %2610 = vmatmul.mubr.bf16.gmra.mxu0 %v2526
        %v2611 = vpop.f32.mrf.mxu0
        %v2612 = vadd.f32 0.0, %v2611
        %v2613 = vpop.f32.mrf.mxu0
        %v2614 = vpop.f32.mrf.mxu0
        %v2615 = vadd.f32 0.0, %v2614
        %v2616 = vpop.f32.mrf.mxu0
        %2617 = vmatprep.mubr.bf16.mxu0 0
        %2618 = vmatmul.mubr.bf16.gmra.mxu0 %v2529
        %v2619 = vpop.f32.mrf.mxu0
        %v2620 = vadd.f32 0.0, %v2619
        %v2621 = vpop.f32.mrf.mxu0
        %v2622 = vpop.f32.mrf.mxu0
        %v2623 = vadd.f32 0.0, %v2622
        %v2624 = vpop.f32.mrf.mxu0
        %2625 = vmatprep.mubr.bf16.mxu0 0
        %2626 = vmatmul.mubr.bf16.gmra.mxu0 %v2532
        %v2627 = vpop.f32.mrf.mxu0
        %v2628 = vadd.f32 0.0, %v2627
        %v2629 = vpop.f32.mrf.mxu0
        %v2630 = vpop.f32.mrf.mxu0
        %v2631 = vadd.f32 0.0, %v2630
        %v2632 = vpop.f32.mrf.mxu0
        %2633 = vdwg.mxu0
        %v2634 = vadd.f32 %v2380, %v2572
        %v2635 = vadd.f32 %v2381, %v2575
        %v2636 = vadd.f32 %v2382, %v2580
        %v2637 = vadd.f32 %v2383, %v2583
        %v2638 = vadd.f32 %v2384, %v2588
        %v2639 = vadd.f32 %v2385, %v2591
        %v2640 = vadd.f32 %v2386, %v2596
        %v2641 = vadd.f32 %v2387, %v2599
        %v2642 = vadd.f32 %v2388, %v2604
        %v2643 = vadd.f32 %v2389, %v2607
        %v2644 = vadd.f32 %v2390, %v2612
        %v2645 = vadd.f32 %v2391, %v2615
        %v2646 = vadd.f32 %v2392, %v2620
        %v2647 = vadd.f32 %v2393, %v2623
        %v2648 = vadd.f32 %v2394, %v2628
        %v2649 = vadd.f32 %v2395, %v2631
        %v2650 = vld [vmem:[%s2] sm:$0x1]
        %v2652 = vlaneseq
        %v2653 = vshrl.u32 %v2652, 7
        %v2654 = vsub.s32 0, %v2653
        %v2655 = vrot.slane %v2650, %v2654
        %v2657 = vadd.f32 %v2634, %v2655
        %v2658 = vadd.f32 %v2635, %v2655
        %v2659 = vadd.f32 %v2636, %v2655
        %v2660 = vadd.f32 %v2637, %v2655
        %v2661 = vadd.f32 %v2638, %v2655
        %v2662 = vadd.f32 %v2639, %v2655
        %v2663 = vadd.f32 %v2640, %v2655
        %v2664 = vadd.f32 %v2641, %v2655
        %v2665 = vadd.f32 %v2642, %v2655
        %v2666 = vadd.f32 %v2643, %v2655
        %v2667 = vadd.f32 %v2644, %v2655
        %v2668 = vadd.f32 %v2645, %v2655
        %v2669 = vadd.f32 %v2646, %v2655
        %v2670 = vadd.f32 %v2647, %v2655
        %v2671 = vadd.f32 %v2648, %v2655
        %v2672 = vadd.f32 %v2649, %v2655
        %v2673 = vmax.f32 %v2657, 0.0
        %v2674 = vmax.f32 %v2658, 0.0
        %v2675 = vmax.f32 %v2659, 0.0
        %v2676 = vmax.f32 %v2660, 0.0
        %v2677 = vmax.f32 %v2661, 0.0
        %v2678 = vmax.f32 %v2662, 0.0
        %v2679 = vmax.f32 %v2663, 0.0
        %v2680 = vmax.f32 %v2664, 0.0
        %v2681 = vmax.f32 %v2665, 0.0
        %v2682 = vmax.f32 %v2666, 0.0
        %v2683 = vmax.f32 %v2667, 0.0
        %v2684 = vmax.f32 %v2668, 0.0
        %v2685 = vmax.f32 %v2669, 0.0
        %v2686 = vmax.f32 %v2670, 0.0
        %v2687 = vmax.f32 %v2671, 0.0
        %v2688 = vmax.f32 %v2672, 0.0
        %v2689 = vpack.c.bf16 %v2674, %v2673
        %v2690 = vpack.c.bf16 %v2676, %v2675
        %v2691 = vpack.c.bf16 %v2678, %v2677
        %v2692 = vpack.c.bf16 %v2680, %v2679
        %v2693 = vpack.c.bf16 %v2682, %v2681
        %v2694 = vpack.c.bf16 %v2684, %v2683
        %v2695 = vpack.c.bf16 %v2686, %v2685
        %v2696 = vpack.c.bf16 %v2688, %v2687
        %v2705 = vunpack.c.l.b16 %v2689
        %v2706 = vunpack.c.h.b16 %v2689
        %v2707 = vunpack.c.l.b16 %v2690
        %v2708 = vunpack.c.h.b16 %v2690
        %v2709 = vunpack.c.l.b16 %v2691
        %v2710 = vunpack.c.h.b16 %v2691
        %v2711 = vunpack.c.l.b16 %v2692
        %v2712 = vunpack.c.h.b16 %v2692
        %v2713 = vunpack.c.l.b16 %v2693
        %v2714 = vunpack.c.h.b16 %v2693
        %v2715 = vunpack.c.l.b16 %v2694
        %v2716 = vunpack.c.h.b16 %v2694
        %v2717 = vunpack.c.l.b16 %v2695
        %v2718 = vunpack.c.h.b16 %v2695
        %v2719 = vunpack.c.l.b16 %v2696
        %v2720 = vunpack.c.h.b16 %v2696
        %v2721 = vpack.c.b16 %v2705, %v2705
        %v2722 = vpack.c.b16 %v2706, %v2706
        %v2723 = vpack.c.b16 %v2707, %v2707
        %v2724 = vpack.c.b16 %v2708, %v2708
        %v2725 = vpack.c.b16 %v2709, %v2709
        %v2726 = vpack.c.b16 %v2710, %v2710
        %v2727 = vpack.c.b16 %v2711, %v2711
        %v2728 = vpack.c.b16 %v2712, %v2712
        %v2729 = vpack.c.b16 %v2713, %v2713
        %v2730 = vpack.c.b16 %v2714, %v2714
        %v2731 = vpack.c.b16 %v2715, %v2715
        %v2732 = vpack.c.b16 %v2716, %v2716
        %v2733 = vpack.c.b16 %v2717, %v2717
        %v2734 = vpack.c.b16 %v2718, %v2718
        %v2735 = vpack.c.b16 %v2719, %v2719
        %v2736 = vpack.c.b16 %v2720, %v2720
        %2753 = vst [vmem:[%s177] sm:$0xf] %v2721
        %2754 = vst [vmem:[%s177 + $0x4] sm:$0xf] %v2722
        %2755 = vst [vmem:[%s177 + $0x8] sm:$0xf] %v2723
        %2756 = vst [vmem:[%s177 + $0xc] sm:$0xf] %v2724
        %2757 = vst [vmem:[%s177 + $0x10] sm:$0xf] %v2725
        %2758 = vst [vmem:[%s177 + $0x14] sm:$0xf] %v2726
        %2759 = vst [vmem:[%s177 + $0x18] sm:$0xf] %v2727
        %2760 = vst [vmem:[%s177 + $0x1c] sm:$0xf] %v2728
        %2761 = vst [vmem:[%s177 + $0x20] sm:$0xf] %v2729
        %2762 = vst [vmem:[%s177 + $0x24] sm:$0xf] %v2730
        %2763 = vst [vmem:[%s177 + $0x28] sm:$0xf] %v2731
        %2764 = vst [vmem:[%s177 + $0x2c] sm:$0xf] %v2732
        %2765 = vst [vmem:[%s177 + $0x30] sm:$0xf] %v2733
        %2766 = vst [vmem:[%s177 + $0x34] sm:$0xf] %v2734
        %2767 = vst [vmem:[%s177 + $0x38] sm:$0xf] %v2735
        %2768 = vst [vmem:[%s177 + $0x3c] sm:$0xf] %v2736
        %s2769 = sand.u32 %s107, 1
        %s2770 = scalar_lea.sflag [#allocation3], %s2769
        %s2771 = sand.u32 %s107, 1
        %s2772 = smul.addr %s2771, 64
        %s2773 = scalar_lea.vmem [#allocation2], %s2772
        // Predicated region
        $region33: #{tpu_custom_call.1} parent=31 // pred_check
          %p2774 = pneg %p117
        $region34: #{tpu_custom_call.1} parent=31 // pred_check_branch
          %2776 = sbr.rel (%p2774) target = $region36
        $region35: #{tpu_custom_call.1} parent=31 // pred_region
          %s2777 = smul.u32 16, %s22
          %s2779 = ssub.s32 1024, 1024
          %2780 = vsyncadd %s2770, %s2779
          %s2781 = smul.addr %s21, 32
          %s2782 = sadd.s32 %s2777, %s2781
          %s2783 = smul.addr %s2782, 64
          %s2784 = scalar_lea.hbm %s3, %s2783
          %s2785 = sshll.u32 %s2773, 4
          %s2786 = int_to_ptr.vmem [resolvable:$true] %s2785
          %2791 = dma.vmem_to_hbm [thread:$0]  %s2786, 1024, %s2784, %s2770, 64, 64, 4
        $region36: #{tpu_custom_call.1} parent=31 // pred_fallthru
          _
      $region32: #{tpu_custom_call.1} parent=5 // pred_fallthru
        _
      %p2792 = scmp.le.s32.totalorder 2, %s12
      // Predicated region
      $region37: #{tpu_custom_call.1} parent=5 // pred_check
        %p2793 = pneg %p2792
      $region38: #{tpu_custom_call.1} parent=5 // pred_check_branch
        %2795 = sbr.rel (%p2793) target = $region40
      $region39: #{tpu_custom_call.1} parent=5 // pred_region
        %s2796 = ssub.s32 %s12, 2
        // Predicated region
        $region41: #{tpu_custom_call.1} parent=39 // pred_check
          %p2797 = pneg %p123
        $region42: #{tpu_custom_call.1} parent=39 // pred_check_branch
          %2799 = sbr.rel (%p2797) target = $region44
        $region43: #{tpu_custom_call.1} parent=39 // pred_region
          %s2800 = sand.u32 %s108, 1
          %s2801 = scalar_lea.sflag [#allocation3], %s2800
          %s2802 = sand.u32 %s108, 1
          %s2803 = smul.addr %s2802, 64
          %s2804 = scalar_lea.vmem [#allocation2], %s2803
          %2805 = dma.done %s2801, 1024
        $region44: #{tpu_custom_call.1} parent=39 // pred_fallthru
          _
      $region40: #{tpu_custom_call.1} parent=5 // pred_fallthru
        _
    $region6: #{tpu_custom_call.1} parent=1 // loop_footer
      %s16 = sadd.s32 1, %s12
    $region7: #{tpu_custom_call.1} parent=1 // loop_footer_branch
      %11 = sbr.rel target = $region3
    $region8: #{tpu_custom_call.1} parent=1 // loop_exit
      _
    %2806 = vsyncpa [#allocation3], 1
    %s2807 = scalar_lea.sflag [#allocation3], 1
    %2808 = vsyncpa %s2807, 1

</llo_original>
